<compile_context>
chip_gen: v7x
topology: tpu7x:2x2x1
jax: 0.10.0
libtpu: 0.0.40
codegen_flags: <defaults>
</compile_context>

<pallas_src>
import functools

import jax
import jax.numpy as jnp
import numpy as np
from jax.experimental import pallas as pl
from jax.experimental.pallas import tpu as pltpu


def _lm_kernel(tok_ref, mask_ref, emb_ref, wqkv_ref, bqkv_ref, w1_ref, b1_ref,
               w2_ref, b2_ref, o_ref, *, flat_attn):
    bt, s, _ = tok_ref.shape
    c_vocab, e = emb_ref.shape            # e == E padded to a multiple of 128
    r = bt * s

    # ---- embedding lookup: one-hot @ VMEM-resident table ----
    # TODO(synk): for large vocabularies (>~2K) switch to a scalar-prefetch / DMA row
    # gather; the full table won't stay VMEM-resident and one-hot FLOPs scale O(R*C*E).
    ids = tok_ref[...].reshape(r, 1)
    cls = jax.lax.broadcasted_iota(jnp.int32, (r, c_vocab), 1)
    onehot = (ids == cls).astype(jnp.bfloat16)
    x = jnp.dot(onehot, emb_ref[...], preferred_element_type=jnp.float32)      # (R, E)

    # ---- fused Q/K/V projection: one (R, E) x (E, 3E) matmul ----
    qkv = jnp.dot(x.astype(jnp.bfloat16), wqkv_ref[...],
                  preferred_element_type=jnp.float32) + bqkv_ref[...]          # (R, 3E)

    # ---- causal-masked attention (reference applies NO 1/sqrt(d) scale) ----
    if flat_attn:
        # Small S: one flat matmul over R = bt*S rows; mask is block-diagonal causal.
        q = qkv[:, :e].astype(jnp.bfloat16)
        k = qkv[:, e:2 * e].astype(jnp.bfloat16)
        v = qkv[:, 2 * e:].astype(jnp.bfloat16)
        scores = jnp.dot(q, k.T, preferred_element_type=jnp.float32) + mask_ref[...]
        m = jnp.max(scores, axis=-1, keepdims=True)
        p = jnp.exp(scores - m)
        p = p * pl.reciprocal(jnp.sum(p, axis=-1, keepdims=True), approx=True)
        att = jnp.dot(p.astype(jnp.bfloat16), v,
                      preferred_element_type=jnp.float32)                      # (R, E)
    else:
        # TODO(synk): for S >= ~512 switch to a KV-tiled online-softmax (flash) loop
        # instead of materializing the full (bt, S, S) score block.
        q = qkv[:, :e].reshape(bt, s, e).astype(jnp.bfloat16)
        k = qkv[:, e:2 * e].reshape(bt, s, e).astype(jnp.bfloat16)
        v = qkv[:, 2 * e:].reshape(bt, s, e).astype(jnp.bfloat16)
        scores = jnp.einsum("bqe,bke->bqk", q, k,
                            preferred_element_type=jnp.float32) + mask_ref[...][None]
        m = jnp.max(scores, axis=-1, keepdims=True)
        p = jnp.exp(scores - m)
        p = p * pl.reciprocal(jnp.sum(p, axis=-1, keepdims=True), approx=True)
        att = jnp.einsum("bqk,bke->bqe", p.astype(jnp.bfloat16), v,
                         preferred_element_type=jnp.float32).reshape(r, e)

    # ---- MLP head ----
    # TODO(synk): at real (E, H, vocab) sizes, K/N-tile fc1/fc2 over a reduction grid
    # axis with an f32 VMEM accumulator + pl.when init/finalize.
    h = jnp.dot(att.astype(jnp.bfloat16), w1_ref[...],
                preferred_element_type=jnp.float32) + b1_ref[...]
    h = jnp.maximum(h, 0.0)
    logits = jnp.dot(h.astype(jnp.bfloat16), w2_ref[...],
                     preferred_element_type=jnp.float32) + b2_ref[...]         # (R, C_out)

    # ---- log_softmax over the class dim (padded cols, if any, carry a -1e30 bias) ----
    lm = jnp.max(logits, axis=-1, keepdims=True)
    lse = jnp.log(jnp.sum(jnp.exp(logits - lm), axis=-1, keepdims=True)) + lm
    o_ref[...] = (logits - lse).reshape(bt, s, -1)


def _round_up(x, m):
    return ((x + m - 1) // m) * m


def _vmem_limit_bytes(operand_bytes):
    """Footprint-derived VMEM limit, capped at 7/8 of physical VMEM (v7x: 64 MiB)."""
    phys = 64 * 1024 * 1024
    try:
        v = getattr(pltpu.get_tpu_info(), "vmem_capacity_bytes", None)
        if v:
            phys = int(v)
    except Exception:
        pass
    want = max(16 * 1024 * 1024, 4 * int(operand_bytes))
    return int(min(want, (phys // 8) * 7))


def self_attention_lm(tokens, params):
    """tokens: (B, S) int ids.  Returns (B, S, num_classes) float32 log-probs."""
    B, S = tokens.shape
    emb = params["embedding"]
    C, E = emb.shape
    H = params["w1"].shape[1]

    # ---- row tiling: ~256 MXU rows per step, whole sequences only, >= 2 grid steps ----
    ROW_TARGET = 256                       # v6e/v7x MXU height; also fine on v5e
    bt = min(B, max(1, ROW_TARGET // S))
    while B % bt:
        bt -= 1
    if B >= 2 and B // bt < 2:             # >= 2 parallel steps keeps both v7x TCs busy
        bt = B // 2
        while B % bt:
            bt -= 1
    nb = B // bt
    R = bt * S
    flat_attn = S <= 64                    # flatten tiny per-sequence attention matmuls

    # ---- lane-dense padding: E, H (and QKV width) to multiples of 128 ----
    E_pad = _round_up(E, 128)
    H_pad = _round_up(H, 128)
    # Class dim: only pad when already large; small C keeps its true width.
    c_out = C if C < 128 else _round_up(C, 128)

    f32, bf16 = jnp.float32, jnp.bfloat16

    def pad2(a, rows, cols):
        return jnp.zeros((rows, cols), f32).at[: a.shape[0], : a.shape[1]].set(a)

    # Fused / padded / cast parameters (would be hoisted & cached in real use).
    emb_p = pad2(emb, C, E_pad).astype(bf16)
    wqkv = jnp.concatenate(
        [pad2(params["wq"], E_pad, E_pad),
         pad2(params["wk"], E_pad, E_pad),
         pad2(params["wv"], E_pad, E_pad)], axis=1).astype(bf16)        # (E_pad, 3*E_pad)
    bqkv = jnp.concatenate(
        [pad2(params["bq"], 1, E_pad),
         pad2(params["bk"], 1, E_pad),
         pad2(params["bv"], 1, E_pad)], axis=1)                         # (1, 3*E_pad) f32
    w1 = pad2(params["w1"], E_pad, H_pad).astype(bf16)
    b1 = pad2(params["b1"], 1, H_pad)
    w2 = pad2(params["w2"], H_pad, c_out).astype(bf16)
    b2 = jnp.full((1, c_out), -1e30, f32).at[:, :C].set(params["b2"])

    # Causal mask built ONCE in the wrapper (no per-step iota/compare inside the kernel).
    if flat_attn:
        pos = np.arange(R)
        ok = ((pos[:, None] // S) == (pos[None, :] // S)) & (pos[None, :] <= pos[:, None])
        mask = jnp.asarray(np.where(ok, 0.0, -1e30), dtype=f32)        # (R, R)
    else:
        pos = np.arange(S)
        mask = jnp.asarray(np.where(pos[None, :] <= pos[:, None], 0.0, -1e30), dtype=f32)

    # Token ids as (B, S, 1): the block's last two dims equal the full array dims for
    # any bt, so the (8,128) block rule is never violated.
    tok3 = tokens.astype(jnp.int32)[:, :, None]

    operands = (tok3, mask, emb_p, wqkv, bqkv, w1, b1, w2, b2)
    operand_bytes = sum(int(a.size) * a.dtype.itemsize for a in operands)
    operand_bytes += B * S * c_out * 4     # output
    vmem_limit = _vmem_limit_bytes(operand_bytes)

    kernel = functools.partial(_lm_kernel, flat_attn=flat_attn)

    def run(single_buffer):
        res_kw = {"pipeline_mode": pl.Buffered(1)} if single_buffer else {}

        def resident(arr):                 # grid-invariant operand: same block every step
            return pl.BlockSpec(arr.shape, lambda b: (0,) * arr.ndim, **res_kw)

        out = pl.pallas_call(
            kernel,
            out_shape=jax.ShapeDtypeStruct((B, S, c_out), jnp.float32),
            grid_spec=pltpu.PrefetchScalarGridSpec(
                num_scalar_prefetch=0,
                grid=(nb,),
                in_specs=[
                    pl.BlockSpec((bt, S, 1), lambda b: (b, 0, 0)),     # token ids
                    resident(mask),
                    resident(emb_p),
                    resident(wqkv), resident(bqkv),
                    resident(w1), resident(b1),
                    resident(w2), resident(b2),
                ],
                out_specs=pl.BlockSpec((bt, S, c_out), lambda b: (b, 0, 0)),
            ),
            compiler_params=pltpu.CompilerParams(
                dimension_semantics=("parallel",),
                vmem_limit_bytes=vmem_limit,
            ),
        )(*operands)
        return out

    try:
        # Single-buffer the grid-invariant weights/table/mask (halves resident VMEM).
        out = jax.block_until_ready(run(single_buffer=True))
    except Exception:
        # Fallback if this jax/TPU combination rejects pipeline_mode=Buffered(1).
        out = run(single_buffer=False)

    return out if c_out == C else out[..., :C]


def _reference(tokens, params):
    """Pure-JAX f32 reference matching the PyTorch forward."""
    x = jnp.take(params["embedding"], tokens, axis=0)
    q = x @ params["wq"] + params["bq"]
    k = x @ params["wk"] + params["bk"]
    v = x @ params["wv"] + params["bv"]
    S = x.shape[1]
    mask = jnp.where(jnp.triu(jnp.ones((S, S), bool), k=1), -jnp.inf, 0.0)
    attn = jnp.einsum("bqe,bke->bqk", q, k) + mask
    attn = jax.nn.softmax(attn, axis=-1)
    att = jnp.einsum("bqk,bke->bqe", attn, v)
    h = jnp.maximum(att @ params["w1"] + params["b1"], 0.0)
    logits = h @ params["w2"] + params["b2"]
    return jax.nn.log_softmax(logits, axis=2)


def _init_params(key, embed_dim, hidden_dim, num_classes):
    ks = jax.random.split(key, 11)
    n = lambda k, shape, scale=0.1: (scale * jax.random.normal(k, shape)).astype(jnp.float32)
    # nn.Linear weight is (out, in); stored pre-transposed as (in, out).
    return {
        "embedding": n(ks[0], (num_classes, embed_dim), 1.0),
        "wq": n(ks[1], (embed_dim, embed_dim)), "bq": n(ks[2], (1, embed_dim)),
        "wk": n(ks[3], (embed_dim, embed_dim)), "bk": n(ks[4], (1, embed_dim)),
        "wv": n(ks[5], (embed_dim, embed_dim)), "bv": n(ks[6], (1, embed_dim)),
        "w1": n(ks[7], (embed_dim, hidden_dim)), "b1": n(ks[8], (1, hidden_dim)),
        "w2": n(ks[9], (hidden_dim, num_classes)), "b2": n(ks[10], (1, num_classes)),
    }


if __name__ == "__main__":
    B, S = 2, 8
    embed_dim, hidden_dim, num_classes = 32, 32, 16

    key = jax.random.PRNGKey(0)
    k_par, k_tok = jax.random.split(key)
    params = _init_params(k_par, embed_dim, hidden_dim, num_classes)
    tokens = jax.random.randint(k_tok, (B, S), 0, num_classes, dtype=jnp.int32)

    out = self_attention_lm(tokens, params)
    out = jax.block_until_ready(out)

    ref = _reference(tokens, params)
    # Tolerance reflects the bf16-input / f32-accumulation matmul policy and the EUP
    # approx reciprocal in the attention softmax vs. the pure-f32 reference.
    np.testing.assert_allclose(np.asarray(out), np.asarray(ref), rtol=5e-2, atol=5e-2)

    print("KERNEL_OK")
</pallas_src>

<mosaic_0001>
module attributes {stable_mosaic.version = 11 : i64} {
  func.func @_lm_kernel(%arg0: i32, %arg1: memref<1x8x1xi32, #tpu.memory_space<vmem>>, %arg2: memref<8x8xf32, #tpu.memory_space<vmem>>, %arg3: memref<16x128xbf16, #tpu.memory_space<vmem>>, %arg4: memref<128x384xbf16, #tpu.memory_space<vmem>>, %arg5: memref<1x384xf32, #tpu.memory_space<vmem>>, %arg6: memref<128x128xbf16, #tpu.memory_space<vmem>>, %arg7: memref<1x128xf32, #tpu.memory_space<vmem>>, %arg8: memref<128x16xbf16, #tpu.memory_space<vmem>>, %arg9: memref<1x16xf32, #tpu.memory_space<vmem>>, %arg10: memref<1x8x16xf32, #tpu.memory_space<vmem>>) attributes {dimension_semantics = [#tpu.dimension_semantics<parallel>], iteration_bounds = array<i64: 2>, scalar_prefetch = 0 : i64, scratch_operands = 0 : i64, tpu.core_type = #tpu.core_type<tc>, window_params = [{transform_indices = @transform_0, window_bounds = array<i64: 1, 8, 1>}, {pipeline_mode = #tpu.pipeline_mode<synchronous>, transform_indices = @transform_1, window_bounds = array<i64: 8, 8>}, {pipeline_mode = #tpu.pipeline_mode<synchronous>, transform_indices = @transform_2, window_bounds = array<i64: 16, 128>}, {pipeline_mode = #tpu.pipeline_mode<synchronous>, transform_indices = @transform_3, window_bounds = array<i64: 128, 384>}, {pipeline_mode = #tpu.pipeline_mode<synchronous>, transform_indices = @transform_4, window_bounds = array<i64: 1, 384>}, {pipeline_mode = #tpu.pipeline_mode<synchronous>, transform_indices = @transform_5, window_bounds = array<i64: 128, 128>}, {pipeline_mode = #tpu.pipeline_mode<synchronous>, transform_indices = @transform_6, window_bounds = array<i64: 1, 128>}, {pipeline_mode = #tpu.pipeline_mode<synchronous>, transform_indices = @transform_7, window_bounds = array<i64: 128, 16>}, {pipeline_mode = #tpu.pipeline_mode<synchronous>, transform_indices = @transform_8, window_bounds = array<i64: 1, 16>}, {transform_indices = @transform_9, window_bounds = array<i64: 1, 8, 16>}]} {
    %c0 = arith.constant 0 : index
    %c0_0 = arith.constant 0 : index
    %c0_1 = arith.constant 0 : index
    %0 = vector.load %arg1[%c0, %c0_0, %c0_1] : memref<1x8x1xi32, #tpu.memory_space<vmem>>, vector<1x8x1xi32>
    %1 = vector.shape_cast %0 : vector<1x8x1xi32> to vector<8x1xi32>
    %2 = tpu.iota {dimensions = array<i32: 1>} : vector<8x16xi32>
    %3 = vector.broadcast %1 : vector<8x1xi32> to vector<8x16xi32>
    %4 = arith.cmpi eq, %3, %2 : vector<8x16xi32>
    %5 = arith.extui %4 : vector<8x16xi1> to vector<8x16xi32>
    %6 = arith.sitofp %5 : vector<8x16xi32> to vector<8x16xf32>
    %7 = arith.truncf %6 : vector<8x16xf32> to vector<8x16xbf16>
    %c0_2 = arith.constant 0 : index
    %c0_3 = arith.constant 0 : index
    %8 = vector.load %arg3[%c0_2, %c0_3] : memref<16x128xbf16, #tpu.memory_space<vmem>>, vector<16x128xbf16>
    %cst = arith.constant dense<0.000000e+00> : vector<8x128xf32>
    %9 = tpu.matmul %7, %8, %cst {dimension_numbers = #tpu.dot_dimension_numbers<[1], [0], [0], [1], [0, 0, 1, 1], [], []>} : vector<8x16xbf16>, vector<16x128xbf16>, vector<8x128xf32> -> vector<8x128xf32>
    %10 = arith.truncf %9 : vector<8x128xf32> to vector<8x128xbf16>
    %c0_4 = arith.constant 0 : index
    %c0_5 = arith.constant 0 : index
    %11 = vector.load %arg4[%c0_4, %c0_5] : memref<128x384xbf16, #tpu.memory_space<vmem>>, vector<128x384xbf16>
    %cst_6 = arith.constant dense<0.000000e+00> : vector<8x384xf32>
    %12 = tpu.matmul %10, %11, %cst_6 {dimension_numbers = #tpu.dot_dimension_numbers<[1], [0], [0], [1], [0, 0, 1, 1], [], []>} : vector<8x128xbf16>, vector<128x384xbf16>, vector<8x384xf32> -> vector<8x384xf32>
    %c0_7 = arith.constant 0 : index
    %c0_8 = arith.constant 0 : index
    %13 = vector.load %arg5[%c0_7, %c0_8] : memref<1x384xf32, #tpu.memory_space<vmem>>, vector<1x384xf32>
    %14 = vector.broadcast %13 : vector<1x384xf32> to vector<8x384xf32>
    %15 = arith.addf %12, %14 : vector<8x384xf32>
    %16 = vector.extract_strided_slice %15 {offsets = [0, 0], sizes = [8, 128], strides = [1, 1]} : vector<8x384xf32> to vector<8x128xf32>
    %17 = arith.truncf %16 : vector<8x128xf32> to vector<8x128xbf16>
    %18 = vector.extract_strided_slice %15 {offsets = [0, 128], sizes = [8, 128], strides = [1, 1]} : vector<8x384xf32> to vector<8x128xf32>
    %19 = arith.truncf %18 : vector<8x128xf32> to vector<8x128xbf16>
    %20 = vector.extract_strided_slice %15 {offsets = [0, 256], sizes = [8, 128], strides = [1, 1]} : vector<8x384xf32> to vector<8x128xf32>
    %21 = arith.truncf %20 : vector<8x128xf32> to vector<8x128xbf16>
    %22 = tpu.transpose %19, [1, 0] : vector<8x128xbf16> -> vector<128x8xbf16>
    %cst_9 = arith.constant dense<0.000000e+00> : vector<8x8xf32>
    %23 = tpu.matmul %17, %22, %cst_9 {dimension_numbers = #tpu.dot_dimension_numbers<[1], [0], [0], [1], [0, 0, 1, 1], [], []>} : vector<8x128xbf16>, vector<128x8xbf16>, vector<8x8xf32> -> vector<8x8xf32>
    %c0_10 = arith.constant 0 : index
    %c0_11 = arith.constant 0 : index
    %24 = vector.load %arg2[%c0_10, %c0_11] : memref<8x8xf32, #tpu.memory_space<vmem>>, vector<8x8xf32>
    %25 = arith.addf %23, %24 : vector<8x8xf32>
    %cst_12 = arith.constant dense<0xFF800000> : vector<8xf32>
    %26 = vector.multi_reduction <maximumf>, %25, %cst_12 [1] : vector<8x8xf32> to vector<8xf32>
    %27 = vector.shape_cast %26 : vector<8xf32> to vector<8x1xf32>
    %28 = vector.broadcast %27 : vector<8x1xf32> to vector<8x8xf32>
    %29 = arith.subf %25, %28 : vector<8x8xf32>
    %30 = math.exp %29 : vector<8x8xf32>
    %cst_13 = arith.constant dense<0.000000e+00> : vector<8xf32>
    %31 = vector.multi_reduction <add>, %30, %cst_13 [1] : vector<8x8xf32> to vector<8xf32>
    %32 = vector.shape_cast %31 : vector<8xf32> to vector<8x1xf32>
    %33 = tpu.reciprocal %32 {approx = true} : vector<8x1xf32> -> vector<8x1xf32>
    %34 = vector.broadcast %33 : vector<8x1xf32> to vector<8x8xf32>
    %35 = arith.mulf %30, %34 : vector<8x8xf32>
    %36 = arith.truncf %35 : vector<8x8xf32> to vector<8x8xbf16>
    %cst_14 = arith.constant dense<0.000000e+00> : vector<8x128xf32>
    %37 = tpu.matmul %36, %21, %cst_14 {dimension_numbers = #tpu.dot_dimension_numbers<[1], [0], [0], [1], [0, 0, 1, 1], [], []>} : vector<8x8xbf16>, vector<8x128xbf16>, vector<8x128xf32> -> vector<8x128xf32>
    %38 = arith.truncf %37 : vector<8x128xf32> to vector<8x128xbf16>
    %c0_15 = arith.constant 0 : index
    %c0_16 = arith.constant 0 : index
    %39 = vector.load %arg6[%c0_15, %c0_16] : memref<128x128xbf16, #tpu.memory_space<vmem>>, vector<128x128xbf16>
    %cst_17 = arith.constant dense<0.000000e+00> : vector<8x128xf32>
    %40 = tpu.matmul %38, %39, %cst_17 {dimension_numbers = #tpu.dot_dimension_numbers<[1], [0], [0], [1], [0, 0, 1, 1], [], []>} : vector<8x128xbf16>, vector<128x128xbf16>, vector<8x128xf32> -> vector<8x128xf32>
    %c0_18 = arith.constant 0 : index
    %c0_19 = arith.constant 0 : index
    %41 = vector.load %arg7[%c0_18, %c0_19] : memref<1x128xf32, #tpu.memory_space<vmem>>, vector<1x128xf32>
    %42 = vector.broadcast %41 : vector<1x128xf32> to vector<8x128xf32>
    %43 = arith.addf %40, %42 : vector<8x128xf32>
    %cst_20 = arith.constant 0.000000e+00 : f32
    %44 = vector.broadcast %cst_20 : f32 to vector<8x128xf32>
    %45 = arith.maximumf %43, %44 : vector<8x128xf32>
    %46 = arith.truncf %45 : vector<8x128xf32> to vector<8x128xbf16>
    %c0_21 = arith.constant 0 : index
    %c0_22 = arith.constant 0 : index
    %47 = vector.load %arg8[%c0_21, %c0_22] : memref<128x16xbf16, #tpu.memory_space<vmem>>, vector<128x16xbf16>
    %cst_23 = arith.constant dense<0.000000e+00> : vector<8x16xf32>
    %48 = tpu.matmul %46, %47, %cst_23 {dimension_numbers = #tpu.dot_dimension_numbers<[1], [0], [0], [1], [0, 0, 1, 1], [], []>} : vector<8x128xbf16>, vector<128x16xbf16>, vector<8x16xf32> -> vector<8x16xf32>
    %c0_24 = arith.constant 0 : index
    %c0_25 = arith.constant 0 : index
    %49 = vector.load %arg9[%c0_24, %c0_25] : memref<1x16xf32, #tpu.memory_space<vmem>>, vector<1x16xf32>
    %50 = vector.broadcast %49 : vector<1x16xf32> to vector<8x16xf32>
    %51 = arith.addf %48, %50 : vector<8x16xf32>
    %cst_26 = arith.constant dense<0xFF800000> : vector<8xf32>
    %52 = vector.multi_reduction <maximumf>, %51, %cst_26 [1] : vector<8x16xf32> to vector<8xf32>
    %53 = vector.shape_cast %52 : vector<8xf32> to vector<8x1xf32>
    %54 = vector.broadcast %53 : vector<8x1xf32> to vector<8x16xf32>
    %55 = arith.subf %51, %54 : vector<8x16xf32>
    %56 = math.exp %55 : vector<8x16xf32>
    %cst_27 = arith.constant dense<0.000000e+00> : vector<8xf32>
    %57 = vector.multi_reduction <add>, %56, %cst_27 [1] : vector<8x16xf32> to vector<8xf32>
    %58 = vector.shape_cast %57 : vector<8xf32> to vector<8x1xf32>
    %59 = math.log %58 : vector<8x1xf32>
    %60 = arith.addf %59, %53 : vector<8x1xf32>
    %61 = vector.broadcast %60 : vector<8x1xf32> to vector<8x16xf32>
    %62 = arith.subf %51, %61 : vector<8x16xf32>
    %63 = vector.shape_cast %62 : vector<8x16xf32> to vector<1x8x16xf32>
    %c0_28 = arith.constant 0 : index
    %c0_29 = arith.constant 0 : index
    %c0_30 = arith.constant 0 : index
    %64 = vector.load %arg10[%c0_28, %c0_29, %c0_30] : memref<1x8x16xf32, #tpu.memory_space<vmem>>, vector<1x8x16xf32>
    tpu.vector_store %arg10[%c0_28, %c0_29, %c0_30], %63 {strides = array<i32>} : memref<1x8x16xf32, #tpu.memory_space<vmem>>, vector<1x8x16xf32>,
    return
  }
  func.func @transform_0(%arg0: i32) -> (i32, i32, i32) {
    %c0_i32 = arith.constant 0 : i32
    %c0_i32_0 = arith.constant 0 : i32
    %c0_i32_1 = arith.constant 0 : i32
    return %arg0, %c0_i32, %c0_i32_0 : i32, i32, i32
  }
  func.func @transform_1(%arg0: i32) -> (i32, i32) {
    %c0_i32 = arith.constant 0 : i32
    %c0_i32_0 = arith.constant 0 : i32
    %c0_i32_1 = arith.constant 0 : i32
    return %c0_i32, %c0_i32_0 : i32, i32
  }
  func.func @transform_2(%arg0: i32) -> (i32, i32) {
    %c0_i32 = arith.constant 0 : i32
    %c0_i32_0 = arith.constant 0 : i32
    %c0_i32_1 = arith.constant 0 : i32
    return %c0_i32, %c0_i32_0 : i32, i32
  }
  func.func @transform_3(%arg0: i32) -> (i32, i32) {
    %c0_i32 = arith.constant 0 : i32
    %c0_i32_0 = arith.constant 0 : i32
    %c0_i32_1 = arith.constant 0 : i32
    return %c0_i32, %c0_i32_0 : i32, i32
  }
  func.func @transform_4(%arg0: i32) -> (i32, i32) {
    %c0_i32 = arith.constant 0 : i32
    %c0_i32_0 = arith.constant 0 : i32
    %c0_i32_1 = arith.constant 0 : i32
    return %c0_i32, %c0_i32_0 : i32, i32
  }
  func.func @transform_5(%arg0: i32) -> (i32, i32) {
    %c0_i32 = arith.constant 0 : i32
    %c0_i32_0 = arith.constant 0 : i32
    %c0_i32_1 = arith.constant 0 : i32
    return %c0_i32, %c0_i32_0 : i32, i32
  }
  func.func @transform_6(%arg0: i32) -> (i32, i32) {
    %c0_i32 = arith.constant 0 : i32
    %c0_i32_0 = arith.constant 0 : i32
    %c0_i32_1 = arith.constant 0 : i32
    return %c0_i32, %c0_i32_0 : i32, i32
  }
  func.func @transform_7(%arg0: i32) -> (i32, i32) {
    %c0_i32 = arith.constant 0 : i32
    %c0_i32_0 = arith.constant 0 : i32
    %c0_i32_1 = arith.constant 0 : i32
    return %c0_i32, %c0_i32_0 : i32, i32
  }
  func.func @transform_8(%arg0: i32) -> (i32, i32) {
    %c0_i32 = arith.constant 0 : i32
    %c0_i32_0 = arith.constant 0 : i32
    %c0_i32_1 = arith.constant 0 : i32
    return %c0_i32, %c0_i32_0 : i32, i32
  }
  func.func @transform_9(%arg0: i32) -> (i32, i32, i32) {
    %c0_i32 = arith.constant 0 : i32
    %c0_i32_0 = arith.constant 0 : i32
    %c0_i32_1 = arith.constant 0 : i32
    return %arg0, %c0_i32, %c0_i32_0 : i32, i32, i32
  }
}

module attributes {stable_mosaic.version = 11 : i64} {
  func.func @_lm_kernel(%arg0: i32, %arg1: memref<1x8x1xi32, #tpu.memory_space<vmem>>, %arg2: memref<8x8xf32, #tpu.memory_space<vmem>>, %arg3: memref<16x128xbf16, #tpu.memory_space<vmem>>, %arg4: memref<128x384xbf16, #tpu.memory_space<vmem>>, %arg5: memref<1x384xf32, #tpu.memory_space<vmem>>, %arg6: memref<128x128xbf16, #tpu.memory_space<vmem>>, %arg7: memref<1x128xf32, #tpu.memory_space<vmem>>, %arg8: memref<128x16xbf16, #tpu.memory_space<vmem>>, %arg9: memref<1x16xf32, #tpu.memory_space<vmem>>, %arg10: memref<1x8x16xf32, #tpu.memory_space<vmem>>) attributes {dimension_semantics = [#tpu.dimension_semantics<parallel>], iteration_bounds = array<i64: 2>, scalar_prefetch = 0 : i64, scratch_operands = 0 : i64, tpu.core_type = #tpu.core_type<tc>, window_params = [{transform_indices = @transform_0, window_bounds = array<i64: 1, 8, 1>}, {pipeline_mode = #tpu.pipeline_mode<synchronous>, transform_indices = @transform_1, window_bounds = array<i64: 8, 8>}, {pipeline_mode = #tpu.pipeline_mode<synchronous>, transform_indices = @transform_2, window_bounds = array<i64: 16, 128>}, {pipeline_mode = #tpu.pipeline_mode<synchronous>, transform_indices = @transform_3, window_bounds = array<i64: 128, 384>}, {pipeline_mode = #tpu.pipeline_mode<synchronous>, transform_indices = @transform_4, window_bounds = array<i64: 1, 384>}, {pipeline_mode = #tpu.pipeline_mode<synchronous>, transform_indices = @transform_5, window_bounds = array<i64: 128, 128>}, {pipeline_mode = #tpu.pipeline_mode<synchronous>, transform_indices = @transform_6, window_bounds = array<i64: 1, 128>}, {pipeline_mode = #tpu.pipeline_mode<synchronous>, transform_indices = @transform_7, window_bounds = array<i64: 128, 16>}, {pipeline_mode = #tpu.pipeline_mode<synchronous>, transform_indices = @transform_8, window_bounds = array<i64: 1, 16>}, {transform_indices = @transform_9, window_bounds = array<i64: 1, 8, 16>}]} {
    %c0 = arith.constant 0 : index
    %c0_0 = arith.constant 0 : index
    %c0_1 = arith.constant 0 : index
    %0 = vector.load %arg1[%c0, %c0_0, %c0_1] : memref<1x8x1xi32, #tpu.memory_space<vmem>>, vector<1x8x1xi32>
    %1 = vector.shape_cast %0 : vector<1x8x1xi32> to vector<8x1xi32>
    %2 = tpu.iota {dimensions = array<i32: 1>} : vector<8x16xi32>
    %3 = vector.broadcast %1 : vector<8x1xi32> to vector<8x16xi32>
    %4 = arith.cmpi eq, %3, %2 : vector<8x16xi32>
    %5 = arith.extui %4 : vector<8x16xi1> to vector<8x16xi32>
    %6 = arith.sitofp %5 : vector<8x16xi32> to vector<8x16xf32>
    %7 = arith.truncf %6 : vector<8x16xf32> to vector<8x16xbf16>
    %c0_2 = arith.constant 0 : index
    %c0_3 = arith.constant 0 : index
    %8 = vector.load %arg3[%c0_2, %c0_3] : memref<16x128xbf16, #tpu.memory_space<vmem>>, vector<16x128xbf16>
    %cst = arith.constant dense<0.000000e+00> : vector<8x128xf32>
    %9 = tpu.matmul %7, %8, %cst {dimension_numbers = #tpu.dot_dimension_numbers<[1], [0], [0], [1], [0, 0, 1, 1], [], []>} : vector<8x16xbf16>, vector<16x128xbf16>, vector<8x128xf32> -> vector<8x128xf32>
    %10 = arith.truncf %9 : vector<8x128xf32> to vector<8x128xbf16>
    %c0_4 = arith.constant 0 : index
    %c0_5 = arith.constant 0 : index
    %11 = vector.load %arg4[%c0_4, %c0_5] : memref<128x384xbf16, #tpu.memory_space<vmem>>, vector<128x384xbf16>
    %cst_6 = arith.constant dense<0.000000e+00> : vector<8x384xf32>
    %12 = tpu.matmul %10, %11, %cst_6 {dimension_numbers = #tpu.dot_dimension_numbers<[1], [0], [0], [1], [0, 0, 1, 1], [], []>} : vector<8x128xbf16>, vector<128x384xbf16>, vector<8x384xf32> -> vector<8x384xf32>
    %c0_7 = arith.constant 0 : index
    %c0_8 = arith.constant 0 : index
    %13 = vector.load %arg5[%c0_7, %c0_8] : memref<1x384xf32, #tpu.memory_space<vmem>>, vector<1x384xf32>
    %14 = vector.broadcast %13 : vector<1x384xf32> to vector<8x384xf32>
    %15 = arith.addf %12, %14 : vector<8x384xf32>
    %16 = vector.extract_strided_slice %15 {offsets = [0, 0], sizes = [8, 128], strides = [1, 1]} : vector<8x384xf32> to vector<8x128xf32>
    %17 = arith.truncf %16 : vector<8x128xf32> to vector<8x128xbf16>
    %18 = vector.extract_strided_slice %15 {offsets = [0, 128], sizes = [8, 128], strides = [1, 1]} : vector<8x384xf32> to vector<8x128xf32>
    %19 = arith.truncf %18 : vector<8x128xf32> to vector<8x128xbf16>
    %20 = vector.extract_strided_slice %15 {offsets = [0, 256], sizes = [8, 128], strides = [1, 1]} : vector<8x384xf32> to vector<8x128xf32>
    %21 = arith.truncf %20 : vector<8x128xf32> to vector<8x128xbf16>
    %22 = tpu.transpose %19, [1, 0] : vector<8x128xbf16> -> vector<128x8xbf16>
    %cst_9 = arith.constant dense<0.000000e+00> : vector<8x8xf32>
    %23 = tpu.matmul %17, %22, %cst_9 {dimension_numbers = #tpu.dot_dimension_numbers<[1], [0], [0], [1], [0, 0, 1, 1], [], []>} : vector<8x128xbf16>, vector<128x8xbf16>, vector<8x8xf32> -> vector<8x8xf32>
    %c0_10 = arith.constant 0 : index
    %c0_11 = arith.constant 0 : index
    %24 = vector.load %arg2[%c0_10, %c0_11] : memref<8x8xf32, #tpu.memory_space<vmem>>, vector<8x8xf32>
    %25 = arith.addf %23, %24 : vector<8x8xf32>
    %cst_12 = arith.constant dense<0xFF800000> : vector<8xf32>
    %26 = vector.multi_reduction <maximumf>, %25, %cst_12 [1] : vector<8x8xf32> to vector<8xf32>
    %27 = vector.shape_cast %26 : vector<8xf32> to vector<8x1xf32>
    %28 = vector.broadcast %27 : vector<8x1xf32> to vector<8x8xf32>
    %29 = arith.subf %25, %28 : vector<8x8xf32>
    %30 = math.exp %29 : vector<8x8xf32>
    %cst_13 = arith.constant dense<0.000000e+00> : vector<8xf32>
    %31 = vector.multi_reduction <add>, %30, %cst_13 [1] : vector<8x8xf32> to vector<8xf32>
    %32 = vector.shape_cast %31 : vector<8xf32> to vector<8x1xf32>
    %33 = tpu.reciprocal %32 {approx = true} : vector<8x1xf32> -> vector<8x1xf32>
    %34 = vector.broadcast %33 : vector<8x1xf32> to vector<8x8xf32>
    %35 = arith.mulf %30, %34 : vector<8x8xf32>
    %36 = arith.truncf %35 : vector<8x8xf32> to vector<8x8xbf16>
    %cst_14 = arith.constant dense<0.000000e+00> : vector<8x128xf32>
    %37 = tpu.matmul %36, %21, %cst_14 {dimension_numbers = #tpu.dot_dimension_numbers<[1], [0], [0], [1], [0, 0, 1, 1], [], []>} : vector<8x8xbf16>, vector<8x128xbf16>, vector<8x128xf32> -> vector<8x128xf32>
    %38 = arith.truncf %37 : vector<8x128xf32> to vector<8x128xbf16>
    %c0_15 = arith.constant 0 : index
    %c0_16 = arith.constant 0 : index
    %39 = vector.load %arg6[%c0_15, %c0_16] : memref<128x128xbf16, #tpu.memory_space<vmem>>, vector<128x128xbf16>
    %cst_17 = arith.constant dense<0.000000e+00> : vector<8x128xf32>
    %40 = tpu.matmul %38, %39, %cst_17 {dimension_numbers = #tpu.dot_dimension_numbers<[1], [0], [0], [1], [0, 0, 1, 1], [], []>} : vector<8x128xbf16>, vector<128x128xbf16>, vector<8x128xf32> -> vector<8x128xf32>
    %c0_18 = arith.constant 0 : index
    %c0_19 = arith.constant 0 : index
    %41 = vector.load %arg7[%c0_18, %c0_19] : memref<1x128xf32, #tpu.memory_space<vmem>>, vector<1x128xf32>
    %42 = vector.broadcast %41 : vector<1x128xf32> to vector<8x128xf32>
    %43 = arith.addf %40, %42 : vector<8x128xf32>
    %cst_20 = arith.constant 0.000000e+00 : f32
    %44 = vector.broadcast %cst_20 : f32 to vector<8x128xf32>
    %45 = arith.maximumf %43, %44 : vector<8x128xf32>
    %46 = arith.truncf %45 : vector<8x128xf32> to vector<8x128xbf16>
    %c0_21 = arith.constant 0 : index
    %c0_22 = arith.constant 0 : index
    %47 = vector.load %arg8[%c0_21, %c0_22] : memref<128x16xbf16, #tpu.memory_space<vmem>>, vector<128x16xbf16>
    %cst_23 = arith.constant dense<0.000000e+00> : vector<8x16xf32>
    %48 = tpu.matmul %46, %47, %cst_23 {dimension_numbers = #tpu.dot_dimension_numbers<[1], [0], [0], [1], [0, 0, 1, 1], [], []>} : vector<8x128xbf16>, vector<128x16xbf16>, vector<8x16xf32> -> vector<8x16xf32>
    %c0_24 = arith.constant 0 : index
    %c0_25 = arith.constant 0 : index
    %49 = vector.load %arg9[%c0_24, %c0_25] : memref<1x16xf32, #tpu.memory_space<vmem>>, vector<1x16xf32>
    %50 = vector.broadcast %49 : vector<1x16xf32> to vector<8x16xf32>
    %51 = arith.addf %48, %50 : vector<8x16xf32>
    %cst_26 = arith.constant dense<0xFF800000> : vector<8xf32>
    %52 = vector.multi_reduction <maximumf>, %51, %cst_26 [1] : vector<8x16xf32> to vector<8xf32>
    %53 = vector.shape_cast %52 : vector<8xf32> to vector<8x1xf32>
    %54 = vector.broadcast %53 : vector<8x1xf32> to vector<8x16xf32>
    %55 = arith.subf %51, %54 : vector<8x16xf32>
    %56 = math.exp %55 : vector<8x16xf32>
    %cst_27 = arith.constant dense<0.000000e+00> : vector<8xf32>
    %57 = vector.multi_reduction <add>, %56, %cst_27 [1] : vector<8x16xf32> to vector<8xf32>
    %58 = vector.shape_cast %57 : vector<8xf32> to vector<8x1xf32>
    %59 = math.log %58 : vector<8x1xf32>
    %60 = arith.addf %59, %53 : vector<8x1xf32>
    %61 = vector.broadcast %60 : vector<8x1xf32> to vector<8x16xf32>
    %62 = arith.subf %51, %61 : vector<8x16xf32>
    %63 = vector.shape_cast %62 : vector<8x16xf32> to vector<1x8x16xf32>
    %c0_28 = arith.constant 0 : index
    %c0_29 = arith.constant 0 : index
    %c0_30 = arith.constant 0 : index
    %64 = vector.load %arg10[%c0_28, %c0_29, %c0_30] : memref<1x8x16xf32, #tpu.memory_space<vmem>>, vector<1x8x16xf32>
    tpu.vector_store %arg10[%c0_28, %c0_29, %c0_30], %63 {strides = array<i32>} : memref<1x8x16xf32, #tpu.memory_space<vmem>>, vector<1x8x16xf32>,
    return
  }
  func.func @transform_0(%arg0: i32) -> (i32, i32, i32) {
    %c0_i32 = arith.constant 0 : i32
    %c0_i32_0 = arith.constant 0 : i32
    %c0_i32_1 = arith.constant 0 : i32
    return %arg0, %c0_i32, %c0_i32_0 : i32, i32, i32
  }
  func.func @transform_1(%arg0: i32) -> (i32, i32) {
    %c0_i32 = arith.constant 0 : i32
    %c0_i32_0 = arith.constant 0 : i32
    %c0_i32_1 = arith.constant 0 : i32
    return %c0_i32, %c0_i32_0 : i32, i32
  }
  func.func @transform_2(%arg0: i32) -> (i32, i32) {
    %c0_i32 = arith.constant 0 : i32
    %c0_i32_0 = arith.constant 0 : i32
    %c0_i32_1 = arith.constant 0 : i32
    return %c0_i32, %c0_i32_0 : i32, i32
  }
  func.func @transform_3(%arg0: i32) -> (i32, i32) {
    %c0_i32 = arith.constant 0 : i32
    %c0_i32_0 = arith.constant 0 : i32
    %c0_i32_1 = arith.constant 0 : i32
    return %c0_i32, %c0_i32_0 : i32, i32
  }
  func.func @transform_4(%arg0: i32) -> (i32, i32) {
    %c0_i32 = arith.constant 0 : i32
    %c0_i32_0 = arith.constant 0 : i32
    %c0_i32_1 = arith.constant 0 : i32
    return %c0_i32, %c0_i32_0 : i32, i32
  }
  func.func @transform_5(%arg0: i32) -> (i32, i32) {
    %c0_i32 = arith.constant 0 : i32
    %c0_i32_0 = arith.constant 0 : i32
    %c0_i32_1 = arith.constant 0 : i32
    return %c0_i32, %c0_i32_0 : i32, i32
  }
  func.func @transform_6(%arg0: i32) -> (i32, i32) {
    %c0_i32 = arith.constant 0 : i32
    %c0_i32_0 = arith.constant 0 : i32
    %c0_i32_1 = arith.constant 0 : i32
    return %c0_i32, %c0_i32_0 : i32, i32
  }
  func.func @transform_7(%arg0: i32) -> (i32, i32) {
    %c0_i32 = arith.constant 0 : i32
    %c0_i32_0 = arith.constant 0 : i32
    %c0_i32_1 = arith.constant 0 : i32
    return %c0_i32, %c0_i32_0 : i32, i32
  }
  func.func @transform_8(%arg0: i32) -> (i32, i32) {
    %c0_i32 = arith.constant 0 : i32
    %c0_i32_0 = arith.constant 0 : i32
    %c0_i32_1 = arith.constant 0 : i32
    return %c0_i32, %c0_i32_0 : i32, i32
  }
  func.func @transform_9(%arg0: i32) -> (i32, i32, i32) {
    %c0_i32 = arith.constant 0 : i32
    %c0_i32_0 = arith.constant 0 : i32
    %c0_i32_1 = arith.constant 0 : i32
    return %arg0, %c0_i32, %c0_i32_0 : i32, i32, i32
  }
}

</mosaic_0001>

<llo_original>
// kernel: tpu_custom_call.1
$region0: #{tpu_custom_call.1}
  #allocation0 [shape = 'u32[]', space=smem, size = 0x4, offset = 0x4, fixed_abs, tag = 'smem constant byte address 0x4 - core index']
  #allocation1 [shape = 'u32[144,128]{1,0:T(1,128)}', space=vmem, size = 0x12000, scoped, tag = 'internal scratch']
  %s0 = inlined_call_operand.vmem [shape: s32[2,8,1], index: 0, kind: input, shape index: {}]
  %s1 = inlined_call_operand.vmem [shape: f32[8,8], index: 1, kind: input, shape index: {}]
  %s2 = inlined_call_operand.vmem [shape: bf16[16,128], index: 2, kind: input, shape index: {}]
  %s3 = inlined_call_operand.hbm [shape: bf16[128,384], index: 3, kind: input, shape index: {}]
  %s4 = inlined_call_operand.vmem [shape: f32[1,384], index: 4, kind: input, shape index: {}]
  %s5 = inlined_call_operand.vmem [shape: bf16[128,128], index: 5, kind: input, shape index: {}]
  %s6 = inlined_call_operand.vmem [shape: f32[1,128], index: 6, kind: input, shape index: {}]
  %s7 = inlined_call_operand.vmem [shape: bf16[128,16], index: 7, kind: input, shape index: {}]
  %s8 = inlined_call_operand.vmem [shape: f32[1,16], index: 8, kind: input, shape index: {}]
  %s9 = inlined_call_operand.hbm [shape: f32[2,8,16], index: 9, kind: output, shape index: {}]
  %s10 = sld [smem:[#allocation0]]
  $region73: #{tpu_custom_call.1} parent=0
    _
  %s12 = ssub.s32 1, %s10
  %s13 = scalar_select 0, %s12, %s10
  $region1: #{tpu_custom_call.1} parent=0
    #allocation2 [shape = 'u8[98304]{0}', space=vmem, size = 0x18000, scoped, tag = 'input window, operand 3, single buffered']
    #allocation3 [shape = 's32[2]{0}', space=sflag, size = 0x8, scoped, tag = 'scoped memory for tpu_custom_call.1']
    #allocation4 [shape = 's32[2]{0}', space=sflag, size = 0x8, scoped, tag = 'scoped memory for tpu_custom_call.1']
    #allocation5 [shape = 'u8[8192]{0}', space=vmem, size = 0x2000, scoped, tag = 'output window, operand 0']
    %14 = vsyncpa [#allocation3], 0
    %15 = vsyncpa [#allocation4], 0
    %s16 = scalar_lea.sflag [#allocation4], 1
    %17 = vsyncpa %s16, 0
    loop: start=0, step=1, limit=4
    $region2: #{tpu_custom_call.1} parent=1 // loop_pre_header
      _
    $region3: #{tpu_custom_call.1} parent=1 // loop_header
      %s19 = sphi 0, %s23
      %p20 = scmp.ge.s32.totalorder %s19, 4
      %s29 = sphi 0, %s31
      %s32 = sphi 0, %s29
      %s33 = sphi 0, %s32
      %s49 = sphi 0, %s33
      %s53 = sphi 0, %s53
      %s55 = sphi 0, %s53
      %s56 = sphi 0, %s55
      %s70 = sphi 0, %s56
      %s74 = sphi 0, %s74
      %s76 = sphi 0, %s74
      %s77 = sphi 0, %s76
      %s91 = sphi 0, %s77
      %s95 = sphi 0, %s95
      %s97 = sphi 0, %s95
      %s98 = sphi 0, %s97
      %s112 = sphi 0, %s98
      %s116 = sphi 0, %s116
      %s118 = sphi 0, %s116
      %s119 = sphi 0, %s118
      %s133 = sphi 0, %s119
      %s137 = sphi 0, %s137
      %s139 = sphi 0, %s137
      %s140 = sphi 0, %s139
      %s154 = sphi 0, %s140
      %s158 = sphi 0, %s158
      %s160 = sphi 0, %s158
      %s161 = sphi 0, %s160
      %s175 = sphi 0, %s161
      %s179 = sphi 0, %s179
      %s181 = sphi 0, %s179
      %s182 = sphi 0, %s181
      %s196 = sphi 0, %s182
      %s200 = sphi 0, %s200
      %s202 = sphi 0, %s200
      %s203 = sphi 0, %s202
      %s217 = sphi 0, %s203
      %s223 = sphi 0, %s225
      %s226 = sphi 0, %s223
      %s227 = sphi 0, %s226
      %s243 = sphi 0, %s227
    $region4: #{tpu_custom_call.1} parent=1 // loop_header_branch
      %22 = sbr.rel (%p20) target = $region8
    $region5: #{tpu_custom_call.1} parent=1 // loop_body
      %s24 = ssub.s32 %s19, 1
      %s25 = ssub.s32 %s19, 2
      %s26 = sadd.s32 %s19, 1
      %s27 = ssub.s32 %s19, %s26
      %p28 = scmp.eq.s32.totalorder %s27, 0
      %s30 = sadd.s32 %s29, 1
      %s31 = scalar_select %p28, %s29, %s30
      %p34 = pneg %p28
      %p35 = scmp.eq.s32.totalorder %s19, 1
      %p36 = por %p34, %p35
      %p37 = scmp.ne.s32.totalorder %s29, %s32
      %p38 = scmp.eq.s32.totalorder %s19, 0
      %p39 = por %p37, %p38
      %p40 = scmp.ne.s32.totalorder %s29, %s32
      %p41 = scmp.eq.s32.totalorder %s24, 1
      %p42 = por %p40, %p41
      %p43 = scmp.ne.s32.totalorder %s32, %s33
      %p44 = scmp.eq.s32.totalorder %s24, 0
      %p45 = por %p43, %p44
      %p46 = scmp.ne.s32.totalorder %s32, %s33
      %p47 = scmp.eq.s32.totalorder %s25, 1
      %p48 = por %p46, %p47
      %p50 = scmp.ne.s32.totalorder %s33, %s49
      %p51 = scmp.eq.s32.totalorder %s25, 0
      %p52 = por %p50, %p51
      %s54 = sadd.s32 %s53, 1
      %p57 = scmp.eq.s32.totalorder %s19, 1
      %p58 = scmp.ne.s32.totalorder %s53, %s55
      %p59 = scmp.eq.s32.totalorder %s19, 0
      %p60 = por %p58, %p59
      %p61 = scmp.ne.s32.totalorder %s53, %s55
      %p62 = scmp.eq.s32.totalorder %s24, 1
      %p63 = por %p61, %p62
      %p64 = scmp.ne.s32.totalorder %s55, %s56
      %p65 = scmp.eq.s32.totalorder %s24, 0
      %p66 = por %p64, %p65
      %p67 = scmp.ne.s32.totalorder %s55, %s56
      %p68 = scmp.eq.s32.totalorder %s25, 1
      %p69 = por %p67, %p68
      %p71 = scmp.ne.s32.totalorder %s56, %s70
      %p72 = scmp.eq.s32.totalorder %s25, 0
      %p73 = por %p71, %p72
      %s75 = sadd.s32 %s74, 1
      %p78 = scmp.eq.s32.totalorder %s19, 1
      %p79 = scmp.ne.s32.totalorder %s74, %s76
      %p80 = scmp.eq.s32.totalorder %s19, 0
      %p81 = por %p79, %p80
      %p82 = scmp.ne.s32.totalorder %s74, %s76
      %p83 = scmp.eq.s32.totalorder %s24, 1
      %p84 = por %p82, %p83
      %p85 = scmp.ne.s32.totalorder %s76, %s77
      %p86 = scmp.eq.s32.totalorder %s24, 0
      %p87 = por %p85, %p86
      %p88 = scmp.ne.s32.totalorder %s76, %s77
      %p89 = scmp.eq.s32.totalorder %s25, 1
      %p90 = por %p88, %p89
      %p92 = scmp.ne.s32.totalorder %s77, %s91
      %p93 = scmp.eq.s32.totalorder %s25, 0
      %p94 = por %p92, %p93
      %s96 = sadd.s32 %s95, 1
      %p99 = scmp.eq.s32.totalorder %s19, 1
      %p100 = scmp.ne.s32.totalorder %s95, %s97
      %p101 = scmp.eq.s32.totalorder %s19, 0
      %p102 = por %p100, %p101
      %p103 = scmp.ne.s32.totalorder %s95, %s97
      %p104 = scmp.eq.s32.totalorder %s24, 1
      %p105 = por %p103, %p104
      %p106 = scmp.ne.s32.totalorder %s97, %s98
      %p107 = scmp.eq.s32.totalorder %s24, 0
      %p108 = por %p106, %p107
      %p109 = scmp.ne.s32.totalorder %s97, %s98
      %p110 = scmp.eq.s32.totalorder %s25, 1
      %p111 = por %p109, %p110
      %p113 = scmp.ne.s32.totalorder %s98, %s112
      %p114 = scmp.eq.s32.totalorder %s25, 0
      %p115 = por %p113, %p114
      %s117 = sadd.s32 %s116, 1
      %p120 = scmp.eq.s32.totalorder %s19, 1
      %p121 = scmp.ne.s32.totalorder %s116, %s118
      %p122 = scmp.eq.s32.totalorder %s19, 0
      %p123 = por %p121, %p122
      %p124 = scmp.ne.s32.totalorder %s116, %s118
      %p125 = scmp.eq.s32.totalorder %s24, 1
      %p126 = por %p124, %p125
      %p127 = scmp.ne.s32.totalorder %s118, %s119
      %p128 = scmp.eq.s32.totalorder %s24, 0
      %p129 = por %p127, %p128
      %p130 = scmp.ne.s32.totalorder %s118, %s119
      %p131 = scmp.eq.s32.totalorder %s25, 1
      %p132 = por %p130, %p131
      %p134 = scmp.ne.s32.totalorder %s119, %s133
      %p135 = scmp.eq.s32.totalorder %s25, 0
      %p136 = por %p134, %p135
      %s138 = sadd.s32 %s137, 1
      %p141 = scmp.eq.s32.totalorder %s19, 1
      %p142 = scmp.ne.s32.totalorder %s137, %s139
      %p143 = scmp.eq.s32.totalorder %s19, 0
      %p144 = por %p142, %p143
      %p145 = scmp.ne.s32.totalorder %s137, %s139
      %p146 = scmp.eq.s32.totalorder %s24, 1
      %p147 = por %p145, %p146
      %p148 = scmp.ne.s32.totalorder %s139, %s140
      %p149 = scmp.eq.s32.totalorder %s24, 0
      %p150 = por %p148, %p149
      %p151 = scmp.ne.s32.totalorder %s139, %s140
      %p152 = scmp.eq.s32.totalorder %s25, 1
      %p153 = por %p151, %p152
      %p155 = scmp.ne.s32.totalorder %s140, %s154
      %p156 = scmp.eq.s32.totalorder %s25, 0
      %p157 = por %p155, %p156
      %s159 = sadd.s32 %s158, 1
      %p162 = scmp.eq.s32.totalorder %s19, 1
      %p163 = scmp.ne.s32.totalorder %s158, %s160
      %p164 = scmp.eq.s32.totalorder %s19, 0
      %p165 = por %p163, %p164
      %p166 = scmp.ne.s32.totalorder %s158, %s160
      %p167 = scmp.eq.s32.totalorder %s24, 1
      %p168 = por %p166, %p167
      %p169 = scmp.ne.s32.totalorder %s160, %s161
      %p170 = scmp.eq.s32.totalorder %s24, 0
      %p171 = por %p169, %p170
      %p172 = scmp.ne.s32.totalorder %s160, %s161
      %p173 = scmp.eq.s32.totalorder %s25, 1
      %p174 = por %p172, %p173
      %p176 = scmp.ne.s32.totalorder %s161, %s175
      %p177 = scmp.eq.s32.totalorder %s25, 0
      %p178 = por %p176, %p177
      %s180 = sadd.s32 %s179, 1
      %p183 = scmp.eq.s32.totalorder %s19, 1
      %p184 = scmp.ne.s32.totalorder %s179, %s181
      %p185 = scmp.eq.s32.totalorder %s19, 0
      %p186 = por %p184, %p185
      %p187 = scmp.ne.s32.totalorder %s179, %s181
      %p188 = scmp.eq.s32.totalorder %s24, 1
      %p189 = por %p187, %p188
      %p190 = scmp.ne.s32.totalorder %s181, %s182
      %p191 = scmp.eq.s32.totalorder %s24, 0
      %p192 = por %p190, %p191
      %p193 = scmp.ne.s32.totalorder %s181, %s182
      %p194 = scmp.eq.s32.totalorder %s25, 1
      %p195 = por %p193, %p194
      %p197 = scmp.ne.s32.totalorder %s182, %s196
      %p198 = scmp.eq.s32.totalorder %s25, 0
      %p199 = por %p197, %p198
      %s201 = sadd.s32 %s200, 1
      %p204 = scmp.eq.s32.totalorder %s19, 1
      %p205 = scmp.ne.s32.totalorder %s200, %s202
      %p206 = scmp.eq.s32.totalorder %s19, 0
      %p207 = por %p205, %p206
      %p208 = scmp.ne.s32.totalorder %s200, %s202
      %p209 = scmp.eq.s32.totalorder %s24, 1
      %p210 = por %p208, %p209
      %p211 = scmp.ne.s32.totalorder %s202, %s203
      %p212 = scmp.eq.s32.totalorder %s24, 0
      %p213 = por %p211, %p212
      %p214 = scmp.ne.s32.totalorder %s202, %s203
      %p215 = scmp.eq.s32.totalorder %s25, 1
      %p216 = por %p214, %p215
      %p218 = scmp.ne.s32.totalorder %s203, %s217
      %p219 = scmp.eq.s32.totalorder %s25, 0
      %p220 = por %p218, %p219
      %s221 = ssub.s32 %s19, %s26
      %p222 = scmp.eq.s32.totalorder %s221, 0
      %s224 = sadd.s32 %s223, 1
      %s225 = scalar_select %p222, %s223, %s224
      %p228 = pneg %p222
      %p229 = scmp.eq.s32.totalorder %s19, 1
      %p230 = por %p228, %p229
      %p231 = scmp.ne.s32.totalorder %s223, %s226
      %p232 = scmp.eq.s32.totalorder %s19, 0
      %p233 = por %p231, %p232
      %p234 = scmp.ne.s32.totalorder %s223, %s226
      %p235 = scmp.eq.s32.totalorder %s24, 1
      %p236 = por %p234, %p235
      %p237 = scmp.ne.s32.totalorder %s226, %s227
      %p238 = scmp.eq.s32.totalorder %s24, 0
      %p239 = por %p237, %p238
      %p240 = scmp.ne.s32.totalorder %s226, %s227
      %p241 = scmp.eq.s32.totalorder %s25, 1
      %p242 = por %p240, %p241
      %p244 = scmp.ne.s32.totalorder %s227, %s243
      %p245 = scmp.eq.s32.totalorder %s25, 0
      %p246 = por %p244, %p245
      %p247 = scmp.le.s32.totalorder 1, %s19
      %p248 = scmp.lt.s32.totalorder %s19, 3
      %p249 = pnand %p247, %p248
      %p250 = pneg %p249
      // Predicated region
      $region9: #{tpu_custom_call.1} parent=5 // pred_check
        _
      $region10: #{tpu_custom_call.1} parent=5 // pred_check_branch
        %252 = sbr.rel (%p249) target = $region12
      $region11: #{tpu_custom_call.1} parent=5 // pred_region
        %s253 = ssub.s32 %s19, 1
        // Predicated region
        $region13: #{tpu_custom_call.1} parent=11 // pred_check
          %p254 = pneg %p66
        $region14: #{tpu_custom_call.1} parent=11 // pred_check_branch
          %256 = sbr.rel (%p254) target = $region16
        $region15: #{tpu_custom_call.1} parent=11 // pred_region
          _
        $region16: #{tpu_custom_call.1} parent=11 // pred_fallthru
          _
        // Predicated region
        $region17: #{tpu_custom_call.1} parent=11 // pred_check
          %p257 = pneg %p87
        $region18: #{tpu_custom_call.1} parent=11 // pred_check_branch
          %259 = sbr.rel (%p257) target = $region20
        $region19: #{tpu_custom_call.1} parent=11 // pred_region
          _
        $region20: #{tpu_custom_call.1} parent=11 // pred_fallthru
          _
        // Predicated region
        $region21: #{tpu_custom_call.1} parent=11 // pred_check
          %p260 = pneg %p108
        $region22: #{tpu_custom_call.1} parent=11 // pred_check_branch
          %262 = sbr.rel (%p260) target = $region24
        $region23: #{tpu_custom_call.1} parent=11 // pred_region
          %s264 = ssub.s32 3072, 3072
          %265 = vsyncadd [#allocation3], %s264
          %s266 = sshll.u32 [#allocation2], 4
          %s267 = int_to_ptr.vmem [resolvable:$true] %s266
          %272 = dma.hbm_to_vmem [thread:$0]  %s3, 3072, %s267, [#allocation3], 192, 192, 12
        $region24: #{tpu_custom_call.1} parent=11 // pred_fallthru
          _
        // Predicated region
        $region25: #{tpu_custom_call.1} parent=11 // pred_check
          %p273 = pneg %p129
        $region26: #{tpu_custom_call.1} parent=11 // pred_check_branch
          %275 = sbr.rel (%p273) target = $region28
        $region27: #{tpu_custom_call.1} parent=11 // pred_region
          _
        $region28: #{tpu_custom_call.1} parent=11 // pred_fallthru
          _
        // Predicated region
        $region29: #{tpu_custom_call.1} parent=11 // pred_check
          %p276 = pneg %p150
        $region30: #{tpu_custom_call.1} parent=11 // pred_check_branch
          %278 = sbr.rel (%p276) target = $region32
        $region31: #{tpu_custom_call.1} parent=11 // pred_region
          _
        $region32: #{tpu_custom_call.1} parent=11 // pred_fallthru
          _
        // Predicated region
        $region33: #{tpu_custom_call.1} parent=11 // pred_check
          %p279 = pneg %p171
        $region34: #{tpu_custom_call.1} parent=11 // pred_check_branch
          %281 = sbr.rel (%p279) target = $region36
        $region35: #{tpu_custom_call.1} parent=11 // pred_region
          _
        $region36: #{tpu_custom_call.1} parent=11 // pred_fallthru
          _
        // Predicated region
        $region37: #{tpu_custom_call.1} parent=11 // pred_check
          %p282 = pneg %p192
        $region38: #{tpu_custom_call.1} parent=11 // pred_check_branch
          %284 = sbr.rel (%p282) target = $region40
        $region39: #{tpu_custom_call.1} parent=11 // pred_region
          _
        $region40: #{tpu_custom_call.1} parent=11 // pred_fallthru
          _
        // Predicated region
        $region41: #{tpu_custom_call.1} parent=11 // pred_check
          %p285 = pneg %p213
        $region42: #{tpu_custom_call.1} parent=11 // pred_check_branch
          %287 = sbr.rel (%p285) target = $region44
        $region43: #{tpu_custom_call.1} parent=11 // pred_region
          _
        $region44: #{tpu_custom_call.1} parent=11 // pred_fallthru
          _
      $region12: #{tpu_custom_call.1} parent=5 // pred_fallthru
        _
      %p288 = scmp.lt.s32.totalorder %s19, 2
      // Predicated region
      $region45: #{tpu_custom_call.1} parent=5 // pred_check
        %p289 = pneg %p288
      $region46: #{tpu_custom_call.1} parent=5 // pred_check_branch
        %291 = sbr.rel (%p289) target = $region48
      $region47: #{tpu_custom_call.1} parent=5 // pred_region
        // Predicated region
        $region49: #{tpu_custom_call.1} parent=47 // pred_check
          %p292 = pneg %p39
        $region50: #{tpu_custom_call.1} parent=47 // pred_check_branch
          %294 = sbr.rel (%p292) target = $region52
        $region51: #{tpu_custom_call.1} parent=47 // pred_region
          %p295 = scmp.lt.s32.totalorder %s19, 1
          %s296 = scalar_select %p295, %s19, 1
          %s297 = smul.addr %s296, 8
          %s298 = scalar_lea.vmem %s0, %s297
        $region52: #{tpu_custom_call.1} parent=47 // pred_fallthru
          _
      $region48: #{tpu_custom_call.1} parent=5 // pred_fallthru
        _
      %p299 = scmp.le.s32.totalorder 1, %s19
      %p300 = scmp.lt.s32.totalorder %s19, 3
      %p301 = pnand %p299, %p300
      %p302 = pneg %p301
      // Predicated region
      $region53: #{tpu_custom_call.1} parent=5 // pred_check
        _
      $region54: #{tpu_custom_call.1} parent=5 // pred_check_branch
        %304 = sbr.rel (%p301) target = $region56
      $region55: #{tpu_custom_call.1} parent=5 // pred_region
        %s305 = ssub.s32 %s19, 1
        // Predicated region
        $region57: #{tpu_custom_call.1} parent=55 // pred_check
          %p306 = pneg %p108
        $region58: #{tpu_custom_call.1} parent=55 // pred_check_branch
          %308 = sbr.rel (%p306) target = $region60
        $region59: #{tpu_custom_call.1} parent=55 // pred_region
          %309 = dma.done [#allocation3], 3072
        $region60: #{tpu_custom_call.1} parent=55 // pred_fallthru
          _
        %p310 = scmp.lt.s32.totalorder %s24, 1
        %s311 = scalar_select %p310, %s24, 1
        %s312 = smul.addr %s311, 8
        %s313 = scalar_lea.vmem %s0, %s312
        %p314 = pneg %p45
        %p315 = pneg %p42
        %p316 = pneg %p66
        %p317 = pneg %p63
        %p318 = pneg %p87
        %p319 = pneg %p84
        %p320 = pneg %p108
        %p321 = pneg %p105
        %p322 = pneg %p129
        %p323 = pneg %p126
        %p324 = pneg %p150
        %p325 = pneg %p147
        %p326 = pneg %p171
        %p327 = pneg %p168
        %p328 = pneg %p192
        %p329 = pneg %p189
        %p330 = pneg %p213
        %p331 = pneg %p210
        %p332 = pneg %p239
        %p333 = pneg %p236
        %s334 = sand.u32 %s226, 1
        %s335 = scalar_lea.sflag [#allocation4], %s334
        %s336 = sand.u32 %s226, 1
        %s337 = smul.addr %s336, 8
        %s338 = scalar_lea.vmem [#allocation5], %s337
        %p339 = scmp.lt.s32.totalorder %s24, 1
        %s340 = scalar_select %p339, %s24, 1
        %s341 = smul.addr %s340, 8
        %s342 = scalar_lea.vmem %s0, %s341
        %v344 = vld [vmem:[%s342] sm:$0xff]
        %v345 = vlaneseq
        %v346 = vand.u32 %v345, 127
        %347 = vset.pattern.permute.xlu0 0
        %348 = vperm.xlu0 %347, %v344
        %v349 = vpop.permute.xlu0 %348
        %vm350 = vcmp.eq.s32.totalorder %v349, %v346
        %v351 = vsel %vm350, 1, 0
        %v352 = vcvt.s32.f32 %v351
        %v353 = vpack.c.bf16 %v352, %v352
        %v354 = vld [vmem:[%s2] sm:$0xf]
        %v355 = vld [vmem:[%s2 + $0x4] sm:$0xf]
        %v358 = vunpack.c.l.b16 %v354
        %v359 = vunpack.c.l.b16 %v355
        %v360 = vpack.c.b16 %v359, %v358
        %vm362 = vcmask 130048
        %v364 = vsel %vm362, %v353, 0
        %366 = vmatprep.subr.bf16.mxu0 0
        %367 = vmatpush1.bf16.msra.mxu0 %v360
        %368 = vmatprep.subr.bf16.mxu0 0
        %369 = vmatpush1.bf16.msra.mxu0 0
        %370 = vmatprep.subr.bf16.mxu0 0
        %371 = vmatpush1.bf16.msra.mxu0 0
        %372 = vmatprep.subr.bf16.mxu0 0
        %373 = vmatpush1.bf16.msra.mxu0 0
        %374 = vmatprep.subr.bf16.mxu0 0
        %375 = vmatpush1.bf16.msra.mxu0 0
        %376 = vmatprep.subr.bf16.mxu0 0
        %377 = vmatpush1.bf16.msra.mxu0 0
        %378 = vmatprep.subr.bf16.mxu0 0
        %379 = vmatpush1.bf16.msra.mxu0 0
        %380 = vmatprep.subr.bf16.mxu0 0
        %381 = vmatpush1.bf16.msra.mxu0 0
        %382 = vmatprep.subr.bf16.mxu0 0
        %383 = vmatpush1.bf16.msra.mxu0 0
        %384 = vmatprep.subr.bf16.mxu0 0
        %385 = vmatpush1.bf16.msra.mxu0 0
        %386 = vmatprep.subr.bf16.mxu0 0
        %387 = vmatpush1.bf16.msra.mxu0 0
        %388 = vmatprep.subr.bf16.mxu0 0
        %389 = vmatpush1.bf16.msra.mxu0 0
        %390 = vmatprep.subr.bf16.mxu0 0
        %391 = vmatpush1.bf16.msra.mxu0 0
        %392 = vmatprep.subr.bf16.mxu0 0
        %393 = vmatpush1.bf16.msra.mxu0 0
        %394 = vmatprep.subr.bf16.mxu0 0
        %395 = vmatpush1.bf16.msra.mxu0 0
        %396 = vmatprep.subr.bf16.mxu0 0
        %397 = vmatpush1.bf16.msra.mxu0 0
        %398 = vmatprep.mubr.bf16.mxu0 0
        %399 = vmatmul.mubr.bf16.gmra.mrb[0].mxu0 %v364
        %v400 = vpop.f32.mrb[0].mxu0
        %v401 = vadd.f32 0.0, %v400
        %v402 = vpop.f32.mrb[0].mxu0
        %v403 = vpop.f32.mrb[0].mxu0
        %v404 = vpop.f32.mrb[0].mxu0
        %405 = vdwg.mxu0
        %v406 = vpack.c.bf16 %v401, %v401
        %v407 = vld [vmem:[#allocation2] sm:$0xff]
        %v408 = vld [vmem:[#allocation2 + $0x8] sm:$0xf]
        %v409 = vld [vmem:[#allocation2 + $0xc] sm:$0xff]
        %v410 = vld [vmem:[#allocation2 + $0x14] sm:$0xf]
        %v411 = vld [vmem:[#allocation2 + $0x18] sm:$0xff]
        %v412 = vld [vmem:[#allocation2 + $0x20] sm:$0xf]
        %v413 = vld [vmem:[#allocation2 + $0x24] sm:$0xff]
        %v414 = vld [vmem:[#allocation2 + $0x2c] sm:$0xf]
        %v415 = vld [vmem:[#allocation2 + $0x30] sm:$0xff]
        %v416 = vld [vmem:[#allocation2 + $0x38] sm:$0xf]
        %v417 = vld [vmem:[#allocation2 + $0x3c] sm:$0xff]
        %v418 = vld [vmem:[#allocation2 + $0x44] sm:$0xf]
        %v419 = vld [vmem:[#allocation2 + $0x48] sm:$0xff]
        %v420 = vld [vmem:[#allocation2 + $0x50] sm:$0xf]
        %v421 = vld [vmem:[#allocation2 + $0x54] sm:$0xff]
        %v422 = vld [vmem:[#allocation2 + $0x5c] sm:$0xf]
        %v423 = vld [vmem:[#allocation2 + $0x60] sm:$0xff]
        %v424 = vld [vmem:[#allocation2 + $0x68] sm:$0xf]
        %v425 = vld [vmem:[#allocation2 + $0x6c] sm:$0xff]
        %v426 = vld [vmem:[#allocation2 + $0x74] sm:$0xf]
        %v427 = vld [vmem:[#allocation2 + $0x78] sm:$0xff]
        %v428 = vld [vmem:[#allocation2 + $0x80] sm:$0xf]
        %v429 = vld [vmem:[#allocation2 + $0x84] sm:$0xff]
        %v430 = vld [vmem:[#allocation2 + $0x8c] sm:$0xf]
        %v431 = vld [vmem:[#allocation2 + $0x90] sm:$0xff]
        %v432 = vld [vmem:[#allocation2 + $0x98] sm:$0xf]
        %v433 = vld [vmem:[#allocation2 + $0x9c] sm:$0xff]
        %v434 = vld [vmem:[#allocation2 + $0xa4] sm:$0xf]
        %v435 = vld [vmem:[#allocation2 + $0xa8] sm:$0xff]
        %v436 = vld [vmem:[#allocation2 + $0xb0] sm:$0xf]
        %v437 = vld [vmem:[#allocation2 + $0xb4] sm:$0xff]
        %v438 = vld [vmem:[#allocation2 + $0xbc] sm:$0xf]
        %v439 = vld [vmem:[%s4] sm:$0x7]
        %v441 = vlaneseq
        %v442 = vshrl.u32 %v441, 7
        %v443 = vsub.s32 0, %v442
        %v444 = vrot.slane %v439, %v443
        %v445 = vlaneseq
        %v446 = vshrl.u32 %v445, 7
        %v447 = vsub.s32 1, %v446
        %v448 = vrot.slane %v439, %v447
        %v449 = vlaneseq
        %v450 = vshrl.u32 %v449, 7
        %v451 = vsub.s32 2, %v450
        %v452 = vrot.slane %v439, %v451
        %v488 = vunpack.c.l.b16 %v407
        %v489 = vunpack.c.h.b16 %v407
        %v490 = vunpack.c.l.b16 %v408
        %v491 = vunpack.c.l.b16 %v409
        %v492 = vunpack.c.h.b16 %v409
        %v493 = vunpack.c.l.b16 %v410
        %v494 = vunpack.c.l.b16 %v411
        %v495 = vunpack.c.h.b16 %v411
        %v496 = vunpack.c.l.b16 %v412
        %v497 = vunpack.c.l.b16 %v413
        %v498 = vunpack.c.h.b16 %v413
        %v499 = vunpack.c.l.b16 %v414
        %v500 = vunpack.c.l.b16 %v415
        %v501 = vunpack.c.h.b16 %v415
        %v502 = vunpack.c.l.b16 %v416
        %v503 = vunpack.c.l.b16 %v417
        %v504 = vunpack.c.h.b16 %v417
        %v505 = vunpack.c.l.b16 %v418
        %v506 = vunpack.c.l.b16 %v419
        %v507 = vunpack.c.h.b16 %v419
        %v508 = vunpack.c.l.b16 %v420
        %v509 = vunpack.c.l.b16 %v421
        %v510 = vunpack.c.h.b16 %v421
        %v511 = vunpack.c.l.b16 %v422
        %v512 = vunpack.c.l.b16 %v423
        %v513 = vunpack.c.h.b16 %v423
        %v514 = vunpack.c.l.b16 %v424
        %v515 = vunpack.c.l.b16 %v425
        %v516 = vunpack.c.h.b16 %v425
        %v517 = vunpack.c.l.b16 %v426
        %v518 = vunpack.c.l.b16 %v427
        %v519 = vunpack.c.h.b16 %v427
        %v520 = vunpack.c.l.b16 %v428
        %v521 = vunpack.c.l.b16 %v429
        %v522 = vunpack.c.h.b16 %v429
        %v523 = vunpack.c.l.b16 %v430
        %v524 = vunpack.c.l.b16 %v431
        %v525 = vunpack.c.h.b16 %v431
        %v526 = vunpack.c.l.b16 %v432
        %v527 = vunpack.c.l.b16 %v433
        %v528 = vunpack.c.h.b16 %v433
        %v529 = vunpack.c.l.b16 %v434
        %v530 = vunpack.c.l.b16 %v435
        %v531 = vunpack.c.h.b16 %v435
        %v532 = vunpack.c.l.b16 %v436
        %v533 = vunpack.c.l.b16 %v437
        %v534 = vunpack.c.h.b16 %v437
        %v535 = vunpack.c.l.b16 %v438
        %v536 = vpack.c.b16 %v491, %v488
        %v537 = vpack.c.b16 %v492, %v489
        %v538 = vpack.c.b16 %v493, %v490
        %v539 = vpack.c.b16 %v497, %v494
        %v540 = vpack.c.b16 %v498, %v495
        %v541 = vpack.c.b16 %v499, %v496
        %v542 = vpack.c.b16 %v503, %v500
        %v543 = vpack.c.b16 %v504, %v501
        %v544 = vpack.c.b16 %v505, %v502
        %v545 = vpack.c.b16 %v509, %v506
        %v546 = vpack.c.b16 %v510, %v507
        %v547 = vpack.c.b16 %v511, %v508
        %v548 = vpack.c.b16 %v515, %v512
        %v549 = vpack.c.b16 %v516, %v513
        %v550 = vpack.c.b16 %v517, %v514
        %v551 = vpack.c.b16 %v521, %v518
        %v552 = vpack.c.b16 %v522, %v519
        %v553 = vpack.c.b16 %v523, %v520
        %v554 = vpack.c.b16 %v527, %v524
        %v555 = vpack.c.b16 %v528, %v525
        %v556 = vpack.c.b16 %v529, %v526
        %v557 = vpack.c.b16 %v533, %v530
        %v558 = vpack.c.b16 %v534, %v531
        %v559 = vpack.c.b16 %v535, %v532
        %584 = vmatprep.subr.bf16.mxu0 %v537
        %585 = vmatpush1.bf16.msra.mxu0 %v536
        %586 = vmatprep.subr.bf16.mxu0 %v540
        %587 = vmatpush1.bf16.msra.mxu0 %v539
        %588 = vmatprep.subr.bf16.mxu0 %v543
        %589 = vmatpush1.bf16.msra.mxu0 %v542
        %590 = vmatprep.subr.bf16.mxu0 %v546
        %591 = vmatpush1.bf16.msra.mxu0 %v545
        %592 = vmatprep.subr.bf16.mxu0 %v549
        %593 = vmatpush1.bf16.msra.mxu0 %v548
        %594 = vmatprep.subr.bf16.mxu0 %v552
        %595 = vmatpush1.bf16.msra.mxu0 %v551
        %596 = vmatprep.subr.bf16.mxu0 %v555
        %597 = vmatpush1.bf16.msra.mxu0 %v554
        %598 = vmatprep.subr.bf16.mxu0 %v558
        %599 = vmatpush1.bf16.msra.mxu0 %v557
        %600 = vmatprep.subr.bf16.mxu0 0
        %601 = vmatpush1.bf16.msra.mxu0 0
        %602 = vmatprep.subr.bf16.mxu0 0
        %603 = vmatpush1.bf16.msra.mxu0 0
        %604 = vmatprep.subr.bf16.mxu0 0
        %605 = vmatpush1.bf16.msra.mxu0 0
        %606 = vmatprep.subr.bf16.mxu0 0
        %607 = vmatpush1.bf16.msra.mxu0 0
        %608 = vmatprep.subr.bf16.mxu0 0
        %609 = vmatpush1.bf16.msra.mxu0 0
        %610 = vmatprep.subr.bf16.mxu0 0
        %611 = vmatpush1.bf16.msra.mxu0 0
        %612 = vmatprep.subr.bf16.mxu0 0
        %613 = vmatpush1.bf16.msra.mxu0 0
        %614 = vmatprep.subr.bf16.mxu0 0
        %615 = vmatpush1.bf16.msra.mxu0 0
        %616 = vmatprep.mubr.bf16.mxu0 0
        %617 = vmatmul.mubr.bf16.gmra.mrb[0].mxu0 %v406
        %v618 = vpop.f32.mrb[0].mxu0
        %v619 = vadd.f32 %v444, %v618
        %v620 = vpop.f32.mrb[0].mxu0
        %v621 = vadd.f32 %v448, %v620
        %v622 = vpop.f32.mrb[0].mxu0
        %v623 = vpop.f32.mrb[0].mxu0
        %624 = vdwg.mxu0
        %625 = vmatprep.subr.bf16.mxu0 0
        %626 = vmatpush1.bf16.msra.mxu0 %v538
        %627 = vmatprep.subr.bf16.mxu0 0
        %628 = vmatpush1.bf16.msra.mxu0 %v541
        %629 = vmatprep.subr.bf16.mxu0 0
        %630 = vmatpush1.bf16.msra.mxu0 %v544
        %631 = vmatprep.subr.bf16.mxu0 0
        %632 = vmatpush1.bf16.msra.mxu0 %v547
        %633 = vmatprep.subr.bf16.mxu0 0
        %634 = vmatpush1.bf16.msra.mxu0 %v550
        %635 = vmatprep.subr.bf16.mxu0 0
        %636 = vmatpush1.bf16.msra.mxu0 %v553
        %637 = vmatprep.subr.bf16.mxu0 0
        %638 = vmatpush1.bf16.msra.mxu0 %v556
        %639 = vmatprep.subr.bf16.mxu0 0
        %640 = vmatpush1.bf16.msra.mxu0 %v559
        %641 = vmatprep.subr.bf16.mxu0 0
        %642 = vmatpush1.bf16.msra.mxu0 0
        %643 = vmatprep.subr.bf16.mxu0 0
        %644 = vmatpush1.bf16.msra.mxu0 0
        %645 = vmatprep.subr.bf16.mxu0 0
        %646 = vmatpush1.bf16.msra.mxu0 0
        %647 = vmatprep.subr.bf16.mxu0 0
        %648 = vmatpush1.bf16.msra.mxu0 0
        %649 = vmatprep.subr.bf16.mxu0 0
        %650 = vmatpush1.bf16.msra.mxu0 0
        %651 = vmatprep.subr.bf16.mxu0 0
        %652 = vmatpush1.bf16.msra.mxu0 0
        %653 = vmatprep.subr.bf16.mxu0 0
        %654 = vmatpush1.bf16.msra.mxu0 0
        %655 = vmatprep.subr.bf16.mxu0 0
        %656 = vmatpush1.bf16.msra.mxu0 0
        %657 = vmatprep.mubr.bf16.mxu0 0
        %658 = vmatmul.mubr.bf16.gmra.mrb[0].mxu0 %v406
        %v659 = vpop.f32.mrb[0].mxu0
        %v660 = vadd.f32 %v452, %v659
        %v661 = vpop.f32.mrb[0].mxu0
        %v662 = vpop.f32.mrb[0].mxu0
        %v663 = vpop.f32.mrb[0].mxu0
        %664 = vdwg.mxu0
        %v665 = vpack.c.bf16 %v619, %v619
        %v666 = vpack.c.bf16 %v621, %v621
        %v667 = vpack.c.bf16 %v660, %v660
        %v668 = vld [vmem:[%s1] sm:$0xff]
        %669 = vmatprep.subr.bf16.mxu0 0
        %670 = vmatpush1.bf16.xpose.msra.mxu0 %v666
        %671 = vmatprep.subr.bf16.mxu0 0
        %672 = vmatpush1.bf16.xpose.msra.mxu0 0
        %673 = vmatprep.subr.bf16.mxu0 0
        %674 = vmatpush1.bf16.xpose.msra.mxu0 0
        %675 = vmatprep.subr.bf16.mxu0 0
        %676 = vmatpush1.bf16.xpose.msra.mxu0 0
        %677 = vmatprep.subr.bf16.mxu0 0
        %678 = vmatpush1.bf16.xpose.msra.mxu0 0
        %679 = vmatprep.subr.bf16.mxu0 0
        %680 = vmatpush1.bf16.xpose.msra.mxu0 0
        %681 = vmatprep.subr.bf16.mxu0 0
        %682 = vmatpush1.bf16.xpose.msra.mxu0 0
        %683 = vmatprep.subr.bf16.mxu0 0
        %684 = vmatpush1.bf16.xpose.msra.mxu0 0
        %685 = vmatprep.subr.bf16.mxu0 0
        %686 = vmatpush1.bf16.xpose.msra.mxu0 0
        %687 = vmatprep.subr.bf16.mxu0 0
        %688 = vmatpush1.bf16.xpose.msra.mxu0 0
        %689 = vmatprep.subr.bf16.mxu0 0
        %690 = vmatpush1.bf16.xpose.msra.mxu0 0
        %691 = vmatprep.subr.bf16.mxu0 0
        %692 = vmatpush1.bf16.xpose.msra.mxu0 0
        %693 = vmatprep.subr.bf16.mxu0 0
        %694 = vmatpush1.bf16.xpose.msra.mxu0 0
        %695 = vmatprep.subr.bf16.mxu0 0
        %696 = vmatpush1.bf16.xpose.msra.mxu0 0
        %697 = vmatprep.subr.bf16.mxu0 0
        %698 = vmatpush1.bf16.xpose.msra.mxu0 0
        %699 = vmatprep.subr.bf16.mxu0 0
        %700 = vmatpush1.bf16.xpose.msra.mxu0 0
        %701 = vmatprep.mubr.bf16.mxu0 0
        %702 = vmatmul.mubr.bf16.gmra.mrb[0].mxu0 %v665
        %v703 = vpop.f32.mrb[0].mxu0
        %v704 = vadd.f32 %v668, %v703
        %v705 = vpop.f32.mrb[0].mxu0
        %v706 = vpop.f32.mrb[0].mxu0
        %v707 = vpop.f32.mrb[0].mxu0
        %708 = vdwg.mxu0
        %vm709 = vcmask 64512
        %v710 = vsel %vm709, %v704, -inf
        %711 = vmax.xlane.f32.xlu0 %v710
        %v712 = vpop.xlane.xlu0 %711
        %v713 = vsub.f32 %v704, %v712
        %v714 = vmul.f32 %v713, 1.442695
        %v715 = vpow.pop %v714
        %v716 = vsel %vm709, %v715, 0.0
        %717 = vadd.xlane.f32.xlu0 %v716
        %v718 = vpop.xlane.xlu0 %717
        %v719 = vrcp.pop %v718
        %v720 = vmul.f32 %v715, %v719
        %v721 = vpack.c.bf16 %v720, %v720
        %v723 = vsel %vm709, %v721, 0
        %vm725 = vcmask 1043456
        %v727 = vsel %vm725, %v667, 0
        %729 = vmatprep.subr.bf16.mxu0 0
        %730 = vmatpush1.bf16.msra.mxu0 %v727
        %731 = vmatprep.subr.bf16.mxu0 0
        %732 = vmatpush1.bf16.msra.mxu0 0
        %733 = vmatprep.subr.bf16.mxu0 0
        %734 = vmatpush1.bf16.msra.mxu0 0
        %735 = vmatprep.subr.bf16.mxu0 0
        %736 = vmatpush1.bf16.msra.mxu0 0
        %737 = vmatprep.subr.bf16.mxu0 0
        %738 = vmatpush1.bf16.msra.mxu0 0
        %739 = vmatprep.subr.bf16.mxu0 0
        %740 = vmatpush1.bf16.msra.mxu0 0
        %741 = vmatprep.subr.bf16.mxu0 0
        %742 = vmatpush1.bf16.msra.mxu0 0
        %743 = vmatprep.subr.bf16.mxu0 0
        %744 = vmatpush1.bf16.msra.mxu0 0
        %745 = vmatprep.subr.bf16.mxu0 0
        %746 = vmatpush1.bf16.msra.mxu0 0
        %747 = vmatprep.subr.bf16.mxu0 0
        %748 = vmatpush1.bf16.msra.mxu0 0
        %749 = vmatprep.subr.bf16.mxu0 0
        %750 = vmatpush1.bf16.msra.mxu0 0
        %751 = vmatprep.subr.bf16.mxu0 0
        %752 = vmatpush1.bf16.msra.mxu0 0
        %753 = vmatprep.subr.bf16.mxu0 0
        %754 = vmatpush1.bf16.msra.mxu0 0
        %755 = vmatprep.subr.bf16.mxu0 0
        %756 = vmatpush1.bf16.msra.mxu0 0
        %757 = vmatprep.subr.bf16.mxu0 0
        %758 = vmatpush1.bf16.msra.mxu0 0
        %759 = vmatprep.subr.bf16.mxu0 0
        %760 = vmatpush1.bf16.msra.mxu0 0
        %761 = vmatprep.mubr.bf16.mxu0 0
        %762 = vmatmul.mubr.bf16.gmra.mrb[0].mxu0 %v723
        %v763 = vpop.f32.mrb[0].mxu0
        %v764 = vadd.f32 0.0, %v763
        %v765 = vpop.f32.mrb[0].mxu0
        %v766 = vpop.f32.mrb[0].mxu0
        %v767 = vpop.f32.mrb[0].mxu0
        %768 = vdwg.mxu0
        %v769 = vpack.c.bf16 %v764, %v764
        %v770 = vld [vmem:[%s5] sm:$0xf]
        %v771 = vld [vmem:[%s5 + $0x4] sm:$0xf]
        %v772 = vld [vmem:[%s5 + $0x8] sm:$0xf]
        %v773 = vld [vmem:[%s5 + $0xc] sm:$0xf]
        %v774 = vld [vmem:[%s5 + $0x10] sm:$0xf]
        %v775 = vld [vmem:[%s5 + $0x14] sm:$0xf]
        %v776 = vld [vmem:[%s5 + $0x18] sm:$0xf]
        %v777 = vld [vmem:[%s5 + $0x1c] sm:$0xf]
        %v778 = vld [vmem:[%s5 + $0x20] sm:$0xf]
        %v779 = vld [vmem:[%s5 + $0x24] sm:$0xf]
        %v780 = vld [vmem:[%s5 + $0x28] sm:$0xf]
        %v781 = vld [vmem:[%s5 + $0x2c] sm:$0xf]
        %v782 = vld [vmem:[%s5 + $0x30] sm:$0xf]
        %v783 = vld [vmem:[%s5 + $0x34] sm:$0xf]
        %v784 = vld [vmem:[%s5 + $0x38] sm:$0xf]
        %v785 = vld [vmem:[%s5 + $0x3c] sm:$0xf]
        %v786 = vld [vmem:[%s6] sm:$0x1]
        %v788 = vlaneseq
        %v789 = vshrl.u32 %v788, 7
        %v790 = vsub.s32 0, %v789
        %v791 = vrot.slane %v786, %v790
        %v809 = vunpack.c.l.b16 %v770
        %v810 = vunpack.c.l.b16 %v771
        %v811 = vunpack.c.l.b16 %v772
        %v812 = vunpack.c.l.b16 %v773
        %v813 = vunpack.c.l.b16 %v774
        %v814 = vunpack.c.l.b16 %v775
        %v815 = vunpack.c.l.b16 %v776
        %v816 = vunpack.c.l.b16 %v777
        %v817 = vunpack.c.l.b16 %v778
        %v818 = vunpack.c.l.b16 %v779
        %v819 = vunpack.c.l.b16 %v780
        %v820 = vunpack.c.l.b16 %v781
        %v821 = vunpack.c.l.b16 %v782
        %v822 = vunpack.c.l.b16 %v783
        %v823 = vunpack.c.l.b16 %v784
        %v824 = vunpack.c.l.b16 %v785
        %v825 = vpack.c.b16 %v810, %v809
        %v826 = vpack.c.b16 %v812, %v811
        %v827 = vpack.c.b16 %v814, %v813
        %v828 = vpack.c.b16 %v816, %v815
        %v829 = vpack.c.b16 %v818, %v817
        %v830 = vpack.c.b16 %v820, %v819
        %v831 = vpack.c.b16 %v822, %v821
        %v832 = vpack.c.b16 %v824, %v823
        %841 = vmatprep.subr.bf16.mxu0 0
        %842 = vmatpush1.bf16.msra.mxu0 %v825
        %843 = vmatprep.subr.bf16.mxu0 0
        %844 = vmatpush1.bf16.msra.mxu0 %v826
        %845 = vmatprep.subr.bf16.mxu0 0
        %846 = vmatpush1.bf16.msra.mxu0 %v827
        %847 = vmatprep.subr.bf16.mxu0 0
        %848 = vmatpush1.bf16.msra.mxu0 %v828
        %849 = vmatprep.subr.bf16.mxu0 0
        %850 = vmatpush1.bf16.msra.mxu0 %v829
        %851 = vmatprep.subr.bf16.mxu0 0
        %852 = vmatpush1.bf16.msra.mxu0 %v830
        %853 = vmatprep.subr.bf16.mxu0 0
        %854 = vmatpush1.bf16.msra.mxu0 %v831
        %855 = vmatprep.subr.bf16.mxu0 0
        %856 = vmatpush1.bf16.msra.mxu0 %v832
        %857 = vmatprep.subr.bf16.mxu0 0
        %858 = vmatpush1.bf16.msra.mxu0 0
        %859 = vmatprep.subr.bf16.mxu0 0
        %860 = vmatpush1.bf16.msra.mxu0 0
        %861 = vmatprep.subr.bf16.mxu0 0
        %862 = vmatpush1.bf16.msra.mxu0 0
        %863 = vmatprep.subr.bf16.mxu0 0
        %864 = vmatpush1.bf16.msra.mxu0 0
        %865 = vmatprep.subr.bf16.mxu0 0
        %866 = vmatpush1.bf16.msra.mxu0 0
        %867 = vmatprep.subr.bf16.mxu0 0
        %868 = vmatpush1.bf16.msra.mxu0 0
        %869 = vmatprep.subr.bf16.mxu0 0
        %870 = vmatpush1.bf16.msra.mxu0 0
        %871 = vmatprep.subr.bf16.mxu0 0
        %872 = vmatpush1.bf16.msra.mxu0 0
        %873 = vmatprep.mubr.bf16.mxu0 0
        %874 = vmatmul.mubr.bf16.gmra.mrb[0].mxu0 %v769
        %v875 = vpop.f32.mrb[0].mxu0
        %v876 = vadd.f32 %v791, %v875
        %v877 = vpop.f32.mrb[0].mxu0
        %v878 = vpop.f32.mrb[0].mxu0
        %v879 = vpop.f32.mrb[0].mxu0
        %880 = vdwg.mxu0
        %v881 = vmax.f32 %v876, 0.0
        %v882 = vpack.c.bf16 %v881, %v881
        %v883 = vld [vmem:[%s7] sm:$0xf]
        %v884 = vld [vmem:[%s7 + $0x4] sm:$0xf]
        %v885 = vld [vmem:[%s7 + $0x8] sm:$0xf]
        %v886 = vld [vmem:[%s7 + $0xc] sm:$0xf]
        %v887 = vld [vmem:[%s7 + $0x10] sm:$0xf]
        %v888 = vld [vmem:[%s7 + $0x14] sm:$0xf]
        %v889 = vld [vmem:[%s7 + $0x18] sm:$0xf]
        %v890 = vld [vmem:[%s7 + $0x1c] sm:$0xf]
        %v891 = vld [vmem:[%s7 + $0x20] sm:$0xf]
        %v892 = vld [vmem:[%s7 + $0x24] sm:$0xf]
        %v893 = vld [vmem:[%s7 + $0x28] sm:$0xf]
        %v894 = vld [vmem:[%s7 + $0x2c] sm:$0xf]
        %v895 = vld [vmem:[%s7 + $0x30] sm:$0xf]
        %v896 = vld [vmem:[%s7 + $0x34] sm:$0xf]
        %v897 = vld [vmem:[%s7 + $0x38] sm:$0xf]
        %v898 = vld [vmem:[%s7 + $0x3c] sm:$0xf]
        %v899 = vld [vmem:[%s8] sm:$0x1]
        %v901 = vlaneseq
        %v902 = vshrl.u32 %v901, 7
        %v903 = vsub.s32 0, %v902
        %v904 = vrot.slane %v899, %v903
        %v922 = vunpack.c.l.b16 %v883
        %v923 = vunpack.c.l.b16 %v884
        %v924 = vunpack.c.l.b16 %v885
        %v925 = vunpack.c.l.b16 %v886
        %v926 = vunpack.c.l.b16 %v887
        %v927 = vunpack.c.l.b16 %v888
        %v928 = vunpack.c.l.b16 %v889
        %v929 = vunpack.c.l.b16 %v890
        %v930 = vunpack.c.l.b16 %v891
        %v931 = vunpack.c.l.b16 %v892
        %v932 = vunpack.c.l.b16 %v893
        %v933 = vunpack.c.l.b16 %v894
        %v934 = vunpack.c.l.b16 %v895
        %v935 = vunpack.c.l.b16 %v896
        %v936 = vunpack.c.l.b16 %v897
        %v937 = vunpack.c.l.b16 %v898
        %v938 = vpack.c.b16 %v923, %v922
        %v939 = vpack.c.b16 %v925, %v924
        %v940 = vpack.c.b16 %v927, %v926
        %v941 = vpack.c.b16 %v929, %v928
        %v942 = vpack.c.b16 %v931, %v930
        %v943 = vpack.c.b16 %v933, %v932
        %v944 = vpack.c.b16 %v935, %v934
        %v945 = vpack.c.b16 %v937, %v936
        %954 = vmatprep.subr.bf16.mxu0 0
        %955 = vmatpush1.bf16.msra.mxu0 %v938
        %956 = vmatprep.subr.bf16.mxu0 0
        %957 = vmatpush1.bf16.msra.mxu0 %v939
        %958 = vmatprep.subr.bf16.mxu0 0
        %959 = vmatpush1.bf16.msra.mxu0 %v940
        %960 = vmatprep.subr.bf16.mxu0 0
        %961 = vmatpush1.bf16.msra.mxu0 %v941
        %962 = vmatprep.subr.bf16.mxu0 0
        %963 = vmatpush1.bf16.msra.mxu0 %v942
        %964 = vmatprep.subr.bf16.mxu0 0
        %965 = vmatpush1.bf16.msra.mxu0 %v943
        %966 = vmatprep.subr.bf16.mxu0 0
        %967 = vmatpush1.bf16.msra.mxu0 %v944
        %968 = vmatprep.subr.bf16.mxu0 0
        %969 = vmatpush1.bf16.msra.mxu0 %v945
        %970 = vmatprep.subr.bf16.mxu0 0
        %971 = vmatpush1.bf16.msra.mxu0 0
        %972 = vmatprep.subr.bf16.mxu0 0
        %973 = vmatpush1.bf16.msra.mxu0 0
        %974 = vmatprep.subr.bf16.mxu0 0
        %975 = vmatpush1.bf16.msra.mxu0 0
        %976 = vmatprep.subr.bf16.mxu0 0
        %977 = vmatpush1.bf16.msra.mxu0 0
        %978 = vmatprep.subr.bf16.mxu0 0
        %979 = vmatpush1.bf16.msra.mxu0 0
        %980 = vmatprep.subr.bf16.mxu0 0
        %981 = vmatpush1.bf16.msra.mxu0 0
        %982 = vmatprep.subr.bf16.mxu0 0
        %983 = vmatpush1.bf16.msra.mxu0 0
        %984 = vmatprep.subr.bf16.mxu0 0
        %985 = vmatpush1.bf16.msra.mxu0 0
        %986 = vmatprep.mubr.bf16.mxu0 0
        %987 = vmatmul.mubr.bf16.gmra.mrb[0].mxu0 %v882
        %v988 = vpop.f32.mrb[0].mxu0
        %v989 = vadd.f32 %v904, %v988
        %v990 = vpop.f32.mrb[0].mxu0
        %v991 = vpop.f32.mrb[0].mxu0
        %v992 = vpop.f32.mrb[0].mxu0
        %993 = vdwg.mxu0
        %v994 = vsel %vm362, %v989, -inf
        %995 = vmax.xlane.f32.xlu0 %v994
        %v996 = vpop.xlane.xlu0 %995
        %v997 = vsub.f32 %v989, %v996
        %v998 = vmul.f32 %v997, 1.442695
        %v999 = vpow.pop %v998
        %v1000 = vsel %vm362, %v999, 0.0
        %1001 = vadd.xlane.f32.xlu0 %v1000
        %v1002 = vpop.xlane.xlu0 %1001
        %v1003 = vlog2.pop %v1002
        %v1004 = vmul.f32 %v1003, 0.6931472
        %v1005 = vadd.f32 %v1004, %v996
        %v1006 = vsub.f32 %v989, %v1005
        %1007 = vst.msk [vmem:[%s338] sm:$0xff] %vm362, %v1006
        %s1008 = sand.u32 %s226, 1
        %s1009 = scalar_lea.sflag [#allocation4], %s1008
        %s1010 = sand.u32 %s226, 1
        %s1011 = smul.addr %s1010, 8
        %s1012 = scalar_lea.vmem [#allocation5], %s1011
        // Predicated region
        $region61: #{tpu_custom_call.1} parent=55 // pred_check
          %p1013 = pneg %p236
        $region62: #{tpu_custom_call.1} parent=55 // pred_check_branch
          %1015 = sbr.rel (%p1013) target = $region64
        $region63: #{tpu_custom_call.1} parent=55 // pred_region
          %s1017 = ssub.s32 128, 128
          %1018 = vsyncadd %s1009, %s1017
          %s1019 = smul.addr %s24, 128
          %s1020 = scalar_lea.hbm %s9, %s1019
          %s1022 = sshll.u32 %s1012, 4
          %s1023 = int_to_ptr.vmem [resolvable:$true] %s1022
          %1025 = dma.vmem_to_hbm [thread:$0]  %s1023, 128, %s1020, %s1009
        $region64: #{tpu_custom_call.1} parent=55 // pred_fallthru
          _
      $region56: #{tpu_custom_call.1} parent=5 // pred_fallthru
        _
      %p1026 = scmp.le.s32.totalorder 2, %s19
      // Predicated region
      $region65: #{tpu_custom_call.1} parent=5 // pred_check
        %p1027 = pneg %p1026
      $region66: #{tpu_custom_call.1} parent=5 // pred_check_branch
        %1029 = sbr.rel (%p1027) target = $region68
      $region67: #{tpu_custom_call.1} parent=5 // pred_region
        %s1030 = ssub.s32 %s19, 2
        // Predicated region
        $region69: #{tpu_custom_call.1} parent=67 // pred_check
          %p1031 = pneg %p242
        $region70: #{tpu_custom_call.1} parent=67 // pred_check_branch
          %1033 = sbr.rel (%p1031) target = $region72
        $region71: #{tpu_custom_call.1} parent=67 // pred_region
          %s1034 = sand.u32 %s227, 1
          %s1035 = scalar_lea.sflag [#allocation4], %s1034
          %s1036 = sand.u32 %s227, 1
          %s1037 = smul.addr %s1036, 8
          %s1038 = scalar_lea.vmem [#allocation5], %s1037
          %1039 = dma.done %s1035, 128
        $region72: #{tpu_custom_call.1} parent=67 // pred_fallthru
          _
      $region68: #{tpu_custom_call.1} parent=5 // pred_fallthru
        _
    $region6: #{tpu_custom_call.1} parent=1 // loop_footer
      %s23 = sadd.s32 1, %s19
    $region7: #{tpu_custom_call.1} parent=1 // loop_footer_branch
      %18 = sbr.rel target = $region3
    $region8: #{tpu_custom_call.1} parent=1 // loop_exit
      _
    %1040 = vsyncpa [#allocation3], 1
    %s1041 = scalar_lea.sflag [#allocation3], 1
    %1042 = vsyncpa %s1041, 1
    %1043 = vsyncpa [#allocation4], 1
    %s1044 = scalar_lea.sflag [#allocation4], 1
    %1045 = vsyncpa %s1044, 1

// kernel: tpu_custom_call.1
$region0: #{tpu_custom_call.1}
  #allocation0 [shape = 'u32[]', space=smem, size = 0x4, offset = 0x4, fixed_abs, tag = 'smem constant byte address 0x4 - core index']
  #allocation1 [shape = 'u32[144,128]{1,0:T(1,128)}', space=vmem, size = 0x12000, scoped, tag = 'internal scratch']
  %s0 = inlined_call_operand.vmem [shape: s32[2,8,1], index: 0, kind: input, shape index: {}]
  %s1 = inlined_call_operand.vmem [shape: f32[8,8], index: 1, kind: input, shape index: {}]
  %s2 = inlined_call_operand.vmem [shape: bf16[16,128], index: 2, kind: input, shape index: {}]
  %s3 = inlined_call_operand.hbm [shape: bf16[128,384], index: 3, kind: input, shape index: {}]
  %s4 = inlined_call_operand.vmem [shape: f32[1,384], index: 4, kind: input, shape index: {}]
  %s5 = inlined_call_operand.vmem [shape: bf16[128,128], index: 5, kind: input, shape index: {}]
  %s6 = inlined_call_operand.vmem [shape: f32[1,128], index: 6, kind: input, shape index: {}]
  %s7 = inlined_call_operand.vmem [shape: bf16[128,16], index: 7, kind: input, shape index: {}]
  %s8 = inlined_call_operand.vmem [shape: f32[1,16], index: 8, kind: input, shape index: {}]
  %s9 = inlined_call_operand.hbm [shape: f32[2,8,16], index: 9, kind: output, shape index: {}]
  %s10 = sld [smem:[#allocation0]]
  $region73: #{tpu_custom_call.1} parent=0
    _
  %s12 = ssub.s32 1, %s10
  %s13 = scalar_select 0, %s12, %s10
  $region1: #{tpu_custom_call.1} parent=0
    #allocation2 [shape = 'u8[98304]{0}', space=vmem, size = 0x18000, scoped, tag = 'input window, operand 3, single buffered']
    #allocation3 [shape = 's32[2]{0}', space=sflag, size = 0x8, scoped, tag = 'scoped memory for tpu_custom_call.1']
    #allocation4 [shape = 's32[2]{0}', space=sflag, size = 0x8, scoped, tag = 'scoped memory for tpu_custom_call.1']
    #allocation5 [shape = 'u8[8192]{0}', space=vmem, size = 0x2000, scoped, tag = 'output window, operand 0']
    %14 = vsyncpa [#allocation3], 0
    %15 = vsyncpa [#allocation4], 0
    %s16 = scalar_lea.sflag [#allocation4], 1
    %17 = vsyncpa %s16, 0
    loop: start=0, step=1, limit=4
    $region2: #{tpu_custom_call.1} parent=1 // loop_pre_header
      _
    $region3: #{tpu_custom_call.1} parent=1 // loop_header
      %s19 = sphi 0, %s23
      %p20 = scmp.ge.s32.totalorder %s19, 4
      %s29 = sphi 0, %s31
      %s32 = sphi 0, %s29
      %s33 = sphi 0, %s32
      %s49 = sphi 0, %s33
      %s53 = sphi 0, %s53
      %s55 = sphi 0, %s53
      %s56 = sphi 0, %s55
      %s70 = sphi 0, %s56
      %s74 = sphi 0, %s74
      %s76 = sphi 0, %s74
      %s77 = sphi 0, %s76
      %s91 = sphi 0, %s77
      %s95 = sphi 0, %s95
      %s97 = sphi 0, %s95
      %s98 = sphi 0, %s97
      %s112 = sphi 0, %s98
      %s116 = sphi 0, %s116
      %s118 = sphi 0, %s116
      %s119 = sphi 0, %s118
      %s133 = sphi 0, %s119
      %s137 = sphi 0, %s137
      %s139 = sphi 0, %s137
      %s140 = sphi 0, %s139
      %s154 = sphi 0, %s140
      %s158 = sphi 0, %s158
      %s160 = sphi 0, %s158
      %s161 = sphi 0, %s160
      %s175 = sphi 0, %s161
      %s179 = sphi 0, %s179
      %s181 = sphi 0, %s179
      %s182 = sphi 0, %s181
      %s196 = sphi 0, %s182
      %s200 = sphi 0, %s200
      %s202 = sphi 0, %s200
      %s203 = sphi 0, %s202
      %s217 = sphi 0, %s203
      %s223 = sphi 0, %s225
      %s226 = sphi 0, %s223
      %s227 = sphi 0, %s226
      %s243 = sphi 0, %s227
    $region4: #{tpu_custom_call.1} parent=1 // loop_header_branch
      %22 = sbr.rel (%p20) target = $region8
    $region5: #{tpu_custom_call.1} parent=1 // loop_body
      %s24 = ssub.s32 %s19, 1
      %s25 = ssub.s32 %s19, 2
      %s26 = sadd.s32 %s19, 1
      %s27 = ssub.s32 %s19, %s26
      %p28 = scmp.eq.s32.totalorder %s27, 0
      %s30 = sadd.s32 %s29, 1
      %s31 = scalar_select %p28, %s29, %s30
      %p34 = pneg %p28
      %p35 = scmp.eq.s32.totalorder %s19, 1
      %p36 = por %p34, %p35
      %p37 = scmp.ne.s32.totalorder %s29, %s32
      %p38 = scmp.eq.s32.totalorder %s19, 0
      %p39 = por %p37, %p38
      %p40 = scmp.ne.s32.totalorder %s29, %s32
      %p41 = scmp.eq.s32.totalorder %s24, 1
      %p42 = por %p40, %p41
      %p43 = scmp.ne.s32.totalorder %s32, %s33
      %p44 = scmp.eq.s32.totalorder %s24, 0
      %p45 = por %p43, %p44
      %p46 = scmp.ne.s32.totalorder %s32, %s33
      %p47 = scmp.eq.s32.totalorder %s25, 1
      %p48 = por %p46, %p47
      %p50 = scmp.ne.s32.totalorder %s33, %s49
      %p51 = scmp.eq.s32.totalorder %s25, 0
      %p52 = por %p50, %p51
      %s54 = sadd.s32 %s53, 1
      %p57 = scmp.eq.s32.totalorder %s19, 1
      %p58 = scmp.ne.s32.totalorder %s53, %s55
      %p59 = scmp.eq.s32.totalorder %s19, 0
      %p60 = por %p58, %p59
      %p61 = scmp.ne.s32.totalorder %s53, %s55
      %p62 = scmp.eq.s32.totalorder %s24, 1
      %p63 = por %p61, %p62
      %p64 = scmp.ne.s32.totalorder %s55, %s56
      %p65 = scmp.eq.s32.totalorder %s24, 0
      %p66 = por %p64, %p65
      %p67 = scmp.ne.s32.totalorder %s55, %s56
      %p68 = scmp.eq.s32.totalorder %s25, 1
      %p69 = por %p67, %p68
      %p71 = scmp.ne.s32.totalorder %s56, %s70
      %p72 = scmp.eq.s32.totalorder %s25, 0
      %p73 = por %p71, %p72
      %s75 = sadd.s32 %s74, 1
      %p78 = scmp.eq.s32.totalorder %s19, 1
      %p79 = scmp.ne.s32.totalorder %s74, %s76
      %p80 = scmp.eq.s32.totalorder %s19, 0
      %p81 = por %p79, %p80
      %p82 = scmp.ne.s32.totalorder %s74, %s76
      %p83 = scmp.eq.s32.totalorder %s24, 1
      %p84 = por %p82, %p83
      %p85 = scmp.ne.s32.totalorder %s76, %s77
      %p86 = scmp.eq.s32.totalorder %s24, 0
      %p87 = por %p85, %p86
      %p88 = scmp.ne.s32.totalorder %s76, %s77
      %p89 = scmp.eq.s32.totalorder %s25, 1
      %p90 = por %p88, %p89
      %p92 = scmp.ne.s32.totalorder %s77, %s91
      %p93 = scmp.eq.s32.totalorder %s25, 0
      %p94 = por %p92, %p93
      %s96 = sadd.s32 %s95, 1
      %p99 = scmp.eq.s32.totalorder %s19, 1
      %p100 = scmp.ne.s32.totalorder %s95, %s97
      %p101 = scmp.eq.s32.totalorder %s19, 0
      %p102 = por %p100, %p101
      %p103 = scmp.ne.s32.totalorder %s95, %s97
      %p104 = scmp.eq.s32.totalorder %s24, 1
      %p105 = por %p103, %p104
      %p106 = scmp.ne.s32.totalorder %s97, %s98
      %p107 = scmp.eq.s32.totalorder %s24, 0
      %p108 = por %p106, %p107
      %p109 = scmp.ne.s32.totalorder %s97, %s98
      %p110 = scmp.eq.s32.totalorder %s25, 1
      %p111 = por %p109, %p110
      %p113 = scmp.ne.s32.totalorder %s98, %s112
      %p114 = scmp.eq.s32.totalorder %s25, 0
      %p115 = por %p113, %p114
      %s117 = sadd.s32 %s116, 1
      %p120 = scmp.eq.s32.totalorder %s19, 1
      %p121 = scmp.ne.s32.totalorder %s116, %s118
      %p122 = scmp.eq.s32.totalorder %s19, 0
      %p123 = por %p121, %p122
      %p124 = scmp.ne.s32.totalorder %s116, %s118
      %p125 = scmp.eq.s32.totalorder %s24, 1
      %p126 = por %p124, %p125
      %p127 = scmp.ne.s32.totalorder %s118, %s119
      %p128 = scmp.eq.s32.totalorder %s24, 0
      %p129 = por %p127, %p128
      %p130 = scmp.ne.s32.totalorder %s118, %s119
      %p131 = scmp.eq.s32.totalorder %s25, 1
      %p132 = por %p130, %p131
      %p134 = scmp.ne.s32.totalorder %s119, %s133
      %p135 = scmp.eq.s32.totalorder %s25, 0
      %p136 = por %p134, %p135
      %s138 = sadd.s32 %s137, 1
      %p141 = scmp.eq.s32.totalorder %s19, 1
      %p142 = scmp.ne.s32.totalorder %s137, %s139
      %p143 = scmp.eq.s32.totalorder %s19, 0
      %p144 = por %p142, %p143
      %p145 = scmp.ne.s32.totalorder %s137, %s139
      %p146 = scmp.eq.s32.totalorder %s24, 1
      %p147 = por %p145, %p146
      %p148 = scmp.ne.s32.totalorder %s139, %s140
      %p149 = scmp.eq.s32.totalorder %s24, 0
      %p150 = por %p148, %p149
      %p151 = scmp.ne.s32.totalorder %s139, %s140
      %p152 = scmp.eq.s32.totalorder %s25, 1
      %p153 = por %p151, %p152
      %p155 = scmp.ne.s32.totalorder %s140, %s154
      %p156 = scmp.eq.s32.totalorder %s25, 0
      %p157 = por %p155, %p156
      %s159 = sadd.s32 %s158, 1
      %p162 = scmp.eq.s32.totalorder %s19, 1
      %p163 = scmp.ne.s32.totalorder %s158, %s160
      %p164 = scmp.eq.s32.totalorder %s19, 0
      %p165 = por %p163, %p164
      %p166 = scmp.ne.s32.totalorder %s158, %s160
      %p167 = scmp.eq.s32.totalorder %s24, 1
      %p168 = por %p166, %p167
      %p169 = scmp.ne.s32.totalorder %s160, %s161
      %p170 = scmp.eq.s32.totalorder %s24, 0
      %p171 = por %p169, %p170
      %p172 = scmp.ne.s32.totalorder %s160, %s161
      %p173 = scmp.eq.s32.totalorder %s25, 1
      %p174 = por %p172, %p173
      %p176 = scmp.ne.s32.totalorder %s161, %s175
      %p177 = scmp.eq.s32.totalorder %s25, 0
      %p178 = por %p176, %p177
      %s180 = sadd.s32 %s179, 1
      %p183 = scmp.eq.s32.totalorder %s19, 1
      %p184 = scmp.ne.s32.totalorder %s179, %s181
      %p185 = scmp.eq.s32.totalorder %s19, 0
      %p186 = por %p184, %p185
      %p187 = scmp.ne.s32.totalorder %s179, %s181
      %p188 = scmp.eq.s32.totalorder %s24, 1
      %p189 = por %p187, %p188
      %p190 = scmp.ne.s32.totalorder %s181, %s182
      %p191 = scmp.eq.s32.totalorder %s24, 0
      %p192 = por %p190, %p191
      %p193 = scmp.ne.s32.totalorder %s181, %s182
      %p194 = scmp.eq.s32.totalorder %s25, 1
      %p195 = por %p193, %p194
      %p197 = scmp.ne.s32.totalorder %s182, %s196
      %p198 = scmp.eq.s32.totalorder %s25, 0
      %p199 = por %p197, %p198
      %s201 = sadd.s32 %s200, 1
      %p204 = scmp.eq.s32.totalorder %s19, 1
      %p205 = scmp.ne.s32.totalorder %s200, %s202
      %p206 = scmp.eq.s32.totalorder %s19, 0
      %p207 = por %p205, %p206
      %p208 = scmp.ne.s32.totalorder %s200, %s202
      %p209 = scmp.eq.s32.totalorder %s24, 1
      %p210 = por %p208, %p209
      %p211 = scmp.ne.s32.totalorder %s202, %s203
      %p212 = scmp.eq.s32.totalorder %s24, 0
      %p213 = por %p211, %p212
      %p214 = scmp.ne.s32.totalorder %s202, %s203
      %p215 = scmp.eq.s32.totalorder %s25, 1
      %p216 = por %p214, %p215
      %p218 = scmp.ne.s32.totalorder %s203, %s217
      %p219 = scmp.eq.s32.totalorder %s25, 0
      %p220 = por %p218, %p219
      %s221 = ssub.s32 %s19, %s26
      %p222 = scmp.eq.s32.totalorder %s221, 0
      %s224 = sadd.s32 %s223, 1
      %s225 = scalar_select %p222, %s223, %s224
      %p228 = pneg %p222
      %p229 = scmp.eq.s32.totalorder %s19, 1
      %p230 = por %p228, %p229
      %p231 = scmp.ne.s32.totalorder %s223, %s226
      %p232 = scmp.eq.s32.totalorder %s19, 0
      %p233 = por %p231, %p232
      %p234 = scmp.ne.s32.totalorder %s223, %s226
      %p235 = scmp.eq.s32.totalorder %s24, 1
      %p236 = por %p234, %p235
      %p237 = scmp.ne.s32.totalorder %s226, %s227
      %p238 = scmp.eq.s32.totalorder %s24, 0
      %p239 = por %p237, %p238
      %p240 = scmp.ne.s32.totalorder %s226, %s227
      %p241 = scmp.eq.s32.totalorder %s25, 1
      %p242 = por %p240, %p241
      %p244 = scmp.ne.s32.totalorder %s227, %s243
      %p245 = scmp.eq.s32.totalorder %s25, 0
      %p246 = por %p244, %p245
      %p247 = scmp.le.s32.totalorder 1, %s19
      %p248 = scmp.lt.s32.totalorder %s19, 3
      %p249 = pnand %p247, %p248
      %p250 = pneg %p249
      // Predicated region
      $region9: #{tpu_custom_call.1} parent=5 // pred_check
        _
      $region10: #{tpu_custom_call.1} parent=5 // pred_check_branch
        %252 = sbr.rel (%p249) target = $region12
      $region11: #{tpu_custom_call.1} parent=5 // pred_region
        %s253 = ssub.s32 %s19, 1
        // Predicated region
        $region13: #{tpu_custom_call.1} parent=11 // pred_check
          %p254 = pneg %p66
        $region14: #{tpu_custom_call.1} parent=11 // pred_check_branch
          %256 = sbr.rel (%p254) target = $region16
        $region15: #{tpu_custom_call.1} parent=11 // pred_region
          _
        $region16: #{tpu_custom_call.1} parent=11 // pred_fallthru
          _
        // Predicated region
        $region17: #{tpu_custom_call.1} parent=11 // pred_check
          %p257 = pneg %p87
        $region18: #{tpu_custom_call.1} parent=11 // pred_check_branch
          %259 = sbr.rel (%p257) target = $region20
        $region19: #{tpu_custom_call.1} parent=11 // pred_region
          _
        $region20: #{tpu_custom_call.1} parent=11 // pred_fallthru
          _
        // Predicated region
        $region21: #{tpu_custom_call.1} parent=11 // pred_check
          %p260 = pneg %p108
        $region22: #{tpu_custom_call.1} parent=11 // pred_check_branch
          %262 = sbr.rel (%p260) target = $region24
        $region23: #{tpu_custom_call.1} parent=11 // pred_region
          %s264 = ssub.s32 3072, 3072
          %265 = vsyncadd [#allocation3], %s264
          %s266 = sshll.u32 [#allocation2], 4
          %s267 = int_to_ptr.vmem [resolvable:$true] %s266
          %272 = dma.hbm_to_vmem [thread:$0]  %s3, 3072, %s267, [#allocation3], 192, 192, 12
        $region24: #{tpu_custom_call.1} parent=11 // pred_fallthru
          _
        // Predicated region
        $region25: #{tpu_custom_call.1} parent=11 // pred_check
          %p273 = pneg %p129
        $region26: #{tpu_custom_call.1} parent=11 // pred_check_branch
          %275 = sbr.rel (%p273) target = $region28
        $region27: #{tpu_custom_call.1} parent=11 // pred_region
          _
        $region28: #{tpu_custom_call.1} parent=11 // pred_fallthru
          _
        // Predicated region
        $region29: #{tpu_custom_call.1} parent=11 // pred_check
          %p276 = pneg %p150
        $region30: #{tpu_custom_call.1} parent=11 // pred_check_branch
          %278 = sbr.rel (%p276) target = $region32
        $region31: #{tpu_custom_call.1} parent=11 // pred_region
          _
        $region32: #{tpu_custom_call.1} parent=11 // pred_fallthru
          _
        // Predicated region
        $region33: #{tpu_custom_call.1} parent=11 // pred_check
          %p279 = pneg %p171
        $region34: #{tpu_custom_call.1} parent=11 // pred_check_branch
          %281 = sbr.rel (%p279) target = $region36
        $region35: #{tpu_custom_call.1} parent=11 // pred_region
          _
        $region36: #{tpu_custom_call.1} parent=11 // pred_fallthru
          _
        // Predicated region
        $region37: #{tpu_custom_call.1} parent=11 // pred_check
          %p282 = pneg %p192
        $region38: #{tpu_custom_call.1} parent=11 // pred_check_branch
          %284 = sbr.rel (%p282) target = $region40
        $region39: #{tpu_custom_call.1} parent=11 // pred_region
          _
        $region40: #{tpu_custom_call.1} parent=11 // pred_fallthru
          _
        // Predicated region
        $region41: #{tpu_custom_call.1} parent=11 // pred_check
          %p285 = pneg %p213
        $region42: #{tpu_custom_call.1} parent=11 // pred_check_branch
          %287 = sbr.rel (%p285) target = $region44
        $region43: #{tpu_custom_call.1} parent=11 // pred_region
          _
        $region44: #{tpu_custom_call.1} parent=11 // pred_fallthru
          _
      $region12: #{tpu_custom_call.1} parent=5 // pred_fallthru
        _
      %p288 = scmp.lt.s32.totalorder %s19, 2
      // Predicated region
      $region45: #{tpu_custom_call.1} parent=5 // pred_check
        %p289 = pneg %p288
      $region46: #{tpu_custom_call.1} parent=5 // pred_check_branch
        %291 = sbr.rel (%p289) target = $region48
      $region47: #{tpu_custom_call.1} parent=5 // pred_region
        // Predicated region
        $region49: #{tpu_custom_call.1} parent=47 // pred_check
          %p292 = pneg %p39
        $region50: #{tpu_custom_call.1} parent=47 // pred_check_branch
          %294 = sbr.rel (%p292) target = $region52
        $region51: #{tpu_custom_call.1} parent=47 // pred_region
          %p295 = scmp.lt.s32.totalorder %s19, 1
          %s296 = scalar_select %p295, %s19, 1
          %s297 = smul.addr %s296, 8
          %s298 = scalar_lea.vmem %s0, %s297
        $region52: #{tpu_custom_call.1} parent=47 // pred_fallthru
          _
      $region48: #{tpu_custom_call.1} parent=5 // pred_fallthru
        _
      %p299 = scmp.le.s32.totalorder 1, %s19
      %p300 = scmp.lt.s32.totalorder %s19, 3
      %p301 = pnand %p299, %p300
      %p302 = pneg %p301
      // Predicated region
      $region53: #{tpu_custom_call.1} parent=5 // pred_check
        _
      $region54: #{tpu_custom_call.1} parent=5 // pred_check_branch
        %304 = sbr.rel (%p301) target = $region56
      $region55: #{tpu_custom_call.1} parent=5 // pred_region
        %s305 = ssub.s32 %s19, 1
        // Predicated region
        $region57: #{tpu_custom_call.1} parent=55 // pred_check
          %p306 = pneg %p108
        $region58: #{tpu_custom_call.1} parent=55 // pred_check_branch
          %308 = sbr.rel (%p306) target = $region60
        $region59: #{tpu_custom_call.1} parent=55 // pred_region
          %309 = dma.done [#allocation3], 3072
        $region60: #{tpu_custom_call.1} parent=55 // pred_fallthru
          _
        %p310 = scmp.lt.s32.totalorder %s24, 1
        %s311 = scalar_select %p310, %s24, 1
        %s312 = smul.addr %s311, 8
        %s313 = scalar_lea.vmem %s0, %s312
        %p314 = pneg %p45
        %p315 = pneg %p42
        %p316 = pneg %p66
        %p317 = pneg %p63
        %p318 = pneg %p87
        %p319 = pneg %p84
        %p320 = pneg %p108
        %p321 = pneg %p105
        %p322 = pneg %p129
        %p323 = pneg %p126
        %p324 = pneg %p150
        %p325 = pneg %p147
        %p326 = pneg %p171
        %p327 = pneg %p168
        %p328 = pneg %p192
        %p329 = pneg %p189
        %p330 = pneg %p213
        %p331 = pneg %p210
        %p332 = pneg %p239
        %p333 = pneg %p236
        %s334 = sand.u32 %s226, 1
        %s335 = scalar_lea.sflag [#allocation4], %s334
        %s336 = sand.u32 %s226, 1
        %s337 = smul.addr %s336, 8
        %s338 = scalar_lea.vmem [#allocation5], %s337
        %p339 = scmp.lt.s32.totalorder %s24, 1
        %s340 = scalar_select %p339, %s24, 1
        %s341 = smul.addr %s340, 8
        %s342 = scalar_lea.vmem %s0, %s341
        %v344 = vld [vmem:[%s342] sm:$0xff]
        %v345 = vlaneseq
        %v346 = vand.u32 %v345, 127
        %347 = vset.pattern.permute.xlu0 0
        %348 = vperm.xlu0 %347, %v344
        %v349 = vpop.permute.xlu0 %348
        %vm350 = vcmp.eq.s32.totalorder %v349, %v346
        %v351 = vsel %vm350, 1, 0
        %v352 = vcvt.s32.f32 %v351
        %v353 = vpack.c.bf16 %v352, %v352
        %v354 = vld [vmem:[%s2] sm:$0xf]
        %v355 = vld [vmem:[%s2 + $0x4] sm:$0xf]
        %v358 = vunpack.c.l.b16 %v354
        %v359 = vunpack.c.l.b16 %v355
        %v360 = vpack.c.b16 %v359, %v358
        %vm362 = vcmask 130048
        %v364 = vsel %vm362, %v353, 0
        %366 = vmatprep.subr.bf16.mxu0 0
        %367 = vmatpush1.bf16.msra.mxu0 %v360
        %368 = vmatprep.subr.bf16.mxu0 0
        %369 = vmatpush1.bf16.msra.mxu0 0
        %370 = vmatprep.subr.bf16.mxu0 0
        %371 = vmatpush1.bf16.msra.mxu0 0
        %372 = vmatprep.subr.bf16.mxu0 0
        %373 = vmatpush1.bf16.msra.mxu0 0
        %374 = vmatprep.subr.bf16.mxu0 0
        %375 = vmatpush1.bf16.msra.mxu0 0
        %376 = vmatprep.subr.bf16.mxu0 0
        %377 = vmatpush1.bf16.msra.mxu0 0
        %378 = vmatprep.subr.bf16.mxu0 0
        %379 = vmatpush1.bf16.msra.mxu0 0
        %380 = vmatprep.subr.bf16.mxu0 0
        %381 = vmatpush1.bf16.msra.mxu0 0
        %382 = vmatprep.subr.bf16.mxu0 0
        %383 = vmatpush1.bf16.msra.mxu0 0
        %384 = vmatprep.subr.bf16.mxu0 0
        %385 = vmatpush1.bf16.msra.mxu0 0
        %386 = vmatprep.subr.bf16.mxu0 0
        %387 = vmatpush1.bf16.msra.mxu0 0
        %388 = vmatprep.subr.bf16.mxu0 0
        %389 = vmatpush1.bf16.msra.mxu0 0
        %390 = vmatprep.subr.bf16.mxu0 0
        %391 = vmatpush1.bf16.msra.mxu0 0
        %392 = vmatprep.subr.bf16.mxu0 0
        %393 = vmatpush1.bf16.msra.mxu0 0
        %394 = vmatprep.subr.bf16.mxu0 0
        %395 = vmatpush1.bf16.msra.mxu0 0
        %396 = vmatprep.subr.bf16.mxu0 0
        %397 = vmatpush1.bf16.msra.mxu0 0
        %398 = vmatprep.mubr.bf16.mxu0 0
        %399 = vmatmul.mubr.bf16.gmra.mrb[0].mxu0 %v364
        %v400 = vpop.f32.mrb[0].mxu0
        %v401 = vadd.f32 0.0, %v400
        %v402 = vpop.f32.mrb[0].mxu0
        %v403 = vpop.f32.mrb[0].mxu0
        %v404 = vpop.f32.mrb[0].mxu0
        %405 = vdwg.mxu0
        %v406 = vpack.c.bf16 %v401, %v401
        %v407 = vld [vmem:[#allocation2] sm:$0xff]
        %v408 = vld [vmem:[#allocation2 + $0x8] sm:$0xf]
        %v409 = vld [vmem:[#allocation2 + $0xc] sm:$0xff]
        %v410 = vld [vmem:[#allocation2 + $0x14] sm:$0xf]
        %v411 = vld [vmem:[#allocation2 + $0x18] sm:$0xff]
        %v412 = vld [vmem:[#allocation2 + $0x20] sm:$0xf]
        %v413 = vld [vmem:[#allocation2 + $0x24] sm:$0xff]
        %v414 = vld [vmem:[#allocation2 + $0x2c] sm:$0xf]
        %v415 = vld [vmem:[#allocation2 + $0x30] sm:$0xff]
        %v416 = vld [vmem:[#allocation2 + $0x38] sm:$0xf]
        %v417 = vld [vmem:[#allocation2 + $0x3c] sm:$0xff]
        %v418 = vld [vmem:[#allocation2 + $0x44] sm:$0xf]
        %v419 = vld [vmem:[#allocation2 + $0x48] sm:$0xff]
        %v420 = vld [vmem:[#allocation2 + $0x50] sm:$0xf]
        %v421 = vld [vmem:[#allocation2 + $0x54] sm:$0xff]
        %v422 = vld [vmem:[#allocation2 + $0x5c] sm:$0xf]
        %v423 = vld [vmem:[#allocation2 + $0x60] sm:$0xff]
        %v424 = vld [vmem:[#allocation2 + $0x68] sm:$0xf]
        %v425 = vld [vmem:[#allocation2 + $0x6c] sm:$0xff]
        %v426 = vld [vmem:[#allocation2 + $0x74] sm:$0xf]
        %v427 = vld [vmem:[#allocation2 + $0x78] sm:$0xff]
        %v428 = vld [vmem:[#allocation2 + $0x80] sm:$0xf]
        %v429 = vld [vmem:[#allocation2 + $0x84] sm:$0xff]
        %v430 = vld [vmem:[#allocation2 + $0x8c] sm:$0xf]
        %v431 = vld [vmem:[#allocation2 + $0x90] sm:$0xff]
        %v432 = vld [vmem:[#allocation2 + $0x98] sm:$0xf]
        %v433 = vld [vmem:[#allocation2 + $0x9c] sm:$0xff]
        %v434 = vld [vmem:[#allocation2 + $0xa4] sm:$0xf]
        %v435 = vld [vmem:[#allocation2 + $0xa8] sm:$0xff]
        %v436 = vld [vmem:[#allocation2 + $0xb0] sm:$0xf]
        %v437 = vld [vmem:[#allocation2 + $0xb4] sm:$0xff]
        %v438 = vld [vmem:[#allocation2 + $0xbc] sm:$0xf]
        %v439 = vld [vmem:[%s4] sm:$0x7]
        %v441 = vlaneseq
        %v442 = vshrl.u32 %v441, 7
        %v443 = vsub.s32 0, %v442
        %v444 = vrot.slane %v439, %v443
        %v445 = vlaneseq
        %v446 = vshrl.u32 %v445, 7
        %v447 = vsub.s32 1, %v446
        %v448 = vrot.slane %v439, %v447
        %v449 = vlaneseq
        %v450 = vshrl.u32 %v449, 7
        %v451 = vsub.s32 2, %v450
        %v452 = vrot.slane %v439, %v451
        %v488 = vunpack.c.l.b16 %v407
        %v489 = vunpack.c.h.b16 %v407
        %v490 = vunpack.c.l.b16 %v408
        %v491 = vunpack.c.l.b16 %v409
        %v492 = vunpack.c.h.b16 %v409
        %v493 = vunpack.c.l.b16 %v410
        %v494 = vunpack.c.l.b16 %v411
        %v495 = vunpack.c.h.b16 %v411
        %v496 = vunpack.c.l.b16 %v412
        %v497 = vunpack.c.l.b16 %v413
        %v498 = vunpack.c.h.b16 %v413
        %v499 = vunpack.c.l.b16 %v414
        %v500 = vunpack.c.l.b16 %v415
        %v501 = vunpack.c.h.b16 %v415
        %v502 = vunpack.c.l.b16 %v416
        %v503 = vunpack.c.l.b16 %v417
        %v504 = vunpack.c.h.b16 %v417
        %v505 = vunpack.c.l.b16 %v418
        %v506 = vunpack.c.l.b16 %v419
        %v507 = vunpack.c.h.b16 %v419
        %v508 = vunpack.c.l.b16 %v420
        %v509 = vunpack.c.l.b16 %v421
        %v510 = vunpack.c.h.b16 %v421
        %v511 = vunpack.c.l.b16 %v422
        %v512 = vunpack.c.l.b16 %v423
        %v513 = vunpack.c.h.b16 %v423
        %v514 = vunpack.c.l.b16 %v424
        %v515 = vunpack.c.l.b16 %v425
        %v516 = vunpack.c.h.b16 %v425
        %v517 = vunpack.c.l.b16 %v426
        %v518 = vunpack.c.l.b16 %v427
        %v519 = vunpack.c.h.b16 %v427
        %v520 = vunpack.c.l.b16 %v428
        %v521 = vunpack.c.l.b16 %v429
        %v522 = vunpack.c.h.b16 %v429
        %v523 = vunpack.c.l.b16 %v430
        %v524 = vunpack.c.l.b16 %v431
        %v525 = vunpack.c.h.b16 %v431
        %v526 = vunpack.c.l.b16 %v432
        %v527 = vunpack.c.l.b16 %v433
        %v528 = vunpack.c.h.b16 %v433
        %v529 = vunpack.c.l.b16 %v434
        %v530 = vunpack.c.l.b16 %v435
        %v531 = vunpack.c.h.b16 %v435
        %v532 = vunpack.c.l.b16 %v436
        %v533 = vunpack.c.l.b16 %v437
        %v534 = vunpack.c.h.b16 %v437
        %v535 = vunpack.c.l.b16 %v438
        %v536 = vpack.c.b16 %v491, %v488
        %v537 = vpack.c.b16 %v492, %v489
        %v538 = vpack.c.b16 %v493, %v490
        %v539 = vpack.c.b16 %v497, %v494
        %v540 = vpack.c.b16 %v498, %v495
        %v541 = vpack.c.b16 %v499, %v496
        %v542 = vpack.c.b16 %v503, %v500
        %v543 = vpack.c.b16 %v504, %v501
        %v544 = vpack.c.b16 %v505, %v502
        %v545 = vpack.c.b16 %v509, %v506
        %v546 = vpack.c.b16 %v510, %v507
        %v547 = vpack.c.b16 %v511, %v508
        %v548 = vpack.c.b16 %v515, %v512
        %v549 = vpack.c.b16 %v516, %v513
        %v550 = vpack.c.b16 %v517, %v514
        %v551 = vpack.c.b16 %v521, %v518
        %v552 = vpack.c.b16 %v522, %v519
        %v553 = vpack.c.b16 %v523, %v520
        %v554 = vpack.c.b16 %v527, %v524
        %v555 = vpack.c.b16 %v528, %v525
        %v556 = vpack.c.b16 %v529, %v526
        %v557 = vpack.c.b16 %v533, %v530
        %v558 = vpack.c.b16 %v534, %v531
        %v559 = vpack.c.b16 %v535, %v532
        %584 = vmatprep.subr.bf16.mxu0 %v537
        %585 = vmatpush1.bf16.msra.mxu0 %v536
        %586 = vmatprep.subr.bf16.mxu0 %v540
        %587 = vmatpush1.bf16.msra.mxu0 %v539
        %588 = vmatprep.subr.bf16.mxu0 %v543
        %589 = vmatpush1.bf16.msra.mxu0 %v542
        %590 = vmatprep.subr.bf16.mxu0 %v546
        %591 = vmatpush1.bf16.msra.mxu0 %v545
        %592 = vmatprep.subr.bf16.mxu0 %v549
        %593 = vmatpush1.bf16.msra.mxu0 %v548
        %594 = vmatprep.subr.bf16.mxu0 %v552
        %595 = vmatpush1.bf16.msra.mxu0 %v551
        %596 = vmatprep.subr.bf16.mxu0 %v555
        %597 = vmatpush1.bf16.msra.mxu0 %v554
        %598 = vmatprep.subr.bf16.mxu0 %v558
        %599 = vmatpush1.bf16.msra.mxu0 %v557
        %600 = vmatprep.subr.bf16.mxu0 0
        %601 = vmatpush1.bf16.msra.mxu0 0
        %602 = vmatprep.subr.bf16.mxu0 0
        %603 = vmatpush1.bf16.msra.mxu0 0
        %604 = vmatprep.subr.bf16.mxu0 0
        %605 = vmatpush1.bf16.msra.mxu0 0
        %606 = vmatprep.subr.bf16.mxu0 0
        %607 = vmatpush1.bf16.msra.mxu0 0
        %608 = vmatprep.subr.bf16.mxu0 0
        %609 = vmatpush1.bf16.msra.mxu0 0
        %610 = vmatprep.subr.bf16.mxu0 0
        %611 = vmatpush1.bf16.msra.mxu0 0
        %612 = vmatprep.subr.bf16.mxu0 0
        %613 = vmatpush1.bf16.msra.mxu0 0
        %614 = vmatprep.subr.bf16.mxu0 0
        %615 = vmatpush1.bf16.msra.mxu0 0
        %616 = vmatprep.mubr.bf16.mxu0 0
        %617 = vmatmul.mubr.bf16.gmra.mrb[0].mxu0 %v406
        %v618 = vpop.f32.mrb[0].mxu0
        %v619 = vadd.f32 %v444, %v618
        %v620 = vpop.f32.mrb[0].mxu0
        %v621 = vadd.f32 %v448, %v620
        %v622 = vpop.f32.mrb[0].mxu0
        %v623 = vpop.f32.mrb[0].mxu0
        %624 = vdwg.mxu0
        %625 = vmatprep.subr.bf16.mxu0 0
        %626 = vmatpush1.bf16.msra.mxu0 %v538
        %627 = vmatprep.subr.bf16.mxu0 0
        %628 = vmatpush1.bf16.msra.mxu0 %v541
        %629 = vmatprep.subr.bf16.mxu0 0
        %630 = vmatpush1.bf16.msra.mxu0 %v544
        %631 = vmatprep.subr.bf16.mxu0 0
        %632 = vmatpush1.bf16.msra.mxu0 %v547
        %633 = vmatprep.subr.bf16.mxu0 0
        %634 = vmatpush1.bf16.msra.mxu0 %v550
        %635 = vmatprep.subr.bf16.mxu0 0
        %636 = vmatpush1.bf16.msra.mxu0 %v553
        %637 = vmatprep.subr.bf16.mxu0 0
        %638 = vmatpush1.bf16.msra.mxu0 %v556
        %639 = vmatprep.subr.bf16.mxu0 0
        %640 = vmatpush1.bf16.msra.mxu0 %v559
        %641 = vmatprep.subr.bf16.mxu0 0
        %642 = vmatpush1.bf16.msra.mxu0 0
        %643 = vmatprep.subr.bf16.mxu0 0
        %644 = vmatpush1.bf16.msra.mxu0 0
        %645 = vmatprep.subr.bf16.mxu0 0
        %646 = vmatpush1.bf16.msra.mxu0 0
        %647 = vmatprep.subr.bf16.mxu0 0
        %648 = vmatpush1.bf16.msra.mxu0 0
        %649 = vmatprep.subr.bf16.mxu0 0
        %650 = vmatpush1.bf16.msra.mxu0 0
        %651 = vmatprep.subr.bf16.mxu0 0
        %652 = vmatpush1.bf16.msra.mxu0 0
        %653 = vmatprep.subr.bf16.mxu0 0
        %654 = vmatpush1.bf16.msra.mxu0 0
        %655 = vmatprep.subr.bf16.mxu0 0
        %656 = vmatpush1.bf16.msra.mxu0 0
        %657 = vmatprep.mubr.bf16.mxu0 0
        %658 = vmatmul.mubr.bf16.gmra.mrb[0].mxu0 %v406
        %v659 = vpop.f32.mrb[0].mxu0
        %v660 = vadd.f32 %v452, %v659
        %v661 = vpop.f32.mrb[0].mxu0
        %v662 = vpop.f32.mrb[0].mxu0
        %v663 = vpop.f32.mrb[0].mxu0
        %664 = vdwg.mxu0
        %v665 = vpack.c.bf16 %v619, %v619
        %v666 = vpack.c.bf16 %v621, %v621
        %v667 = vpack.c.bf16 %v660, %v660
        %v668 = vld [vmem:[%s1] sm:$0xff]
        %669 = vmatprep.subr.bf16.mxu0 0
        %670 = vmatpush1.bf16.xpose.msra.mxu0 %v666
        %671 = vmatprep.subr.bf16.mxu0 0
        %672 = vmatpush1.bf16.xpose.msra.mxu0 0
        %673 = vmatprep.subr.bf16.mxu0 0
        %674 = vmatpush1.bf16.xpose.msra.mxu0 0
        %675 = vmatprep.subr.bf16.mxu0 0
        %676 = vmatpush1.bf16.xpose.msra.mxu0 0
        %677 = vmatprep.subr.bf16.mxu0 0
        %678 = vmatpush1.bf16.xpose.msra.mxu0 0
        %679 = vmatprep.subr.bf16.mxu0 0
        %680 = vmatpush1.bf16.xpose.msra.mxu0 0
        %681 = vmatprep.subr.bf16.mxu0 0
        %682 = vmatpush1.bf16.xpose.msra.mxu0 0
        %683 = vmatprep.subr.bf16.mxu0 0
        %684 = vmatpush1.bf16.xpose.msra.mxu0 0
        %685 = vmatprep.subr.bf16.mxu0 0
        %686 = vmatpush1.bf16.xpose.msra.mxu0 0
        %687 = vmatprep.subr.bf16.mxu0 0
        %688 = vmatpush1.bf16.xpose.msra.mxu0 0
        %689 = vmatprep.subr.bf16.mxu0 0
        %690 = vmatpush1.bf16.xpose.msra.mxu0 0
        %691 = vmatprep.subr.bf16.mxu0 0
        %692 = vmatpush1.bf16.xpose.msra.mxu0 0
        %693 = vmatprep.subr.bf16.mxu0 0
        %694 = vmatpush1.bf16.xpose.msra.mxu0 0
        %695 = vmatprep.subr.bf16.mxu0 0
        %696 = vmatpush1.bf16.xpose.msra.mxu0 0
        %697 = vmatprep.subr.bf16.mxu0 0
        %698 = vmatpush1.bf16.xpose.msra.mxu0 0
        %699 = vmatprep.subr.bf16.mxu0 0
        %700 = vmatpush1.bf16.xpose.msra.mxu0 0
        %701 = vmatprep.mubr.bf16.mxu0 0
        %702 = vmatmul.mubr.bf16.gmra.mrb[0].mxu0 %v665
        %v703 = vpop.f32.mrb[0].mxu0
        %v704 = vadd.f32 %v668, %v703
        %v705 = vpop.f32.mrb[0].mxu0
        %v706 = vpop.f32.mrb[0].mxu0
        %v707 = vpop.f32.mrb[0].mxu0
        %708 = vdwg.mxu0
        %vm709 = vcmask 64512
        %v710 = vsel %vm709, %v704, -inf
        %711 = vmax.xlane.f32.xlu0 %v710
        %v712 = vpop.xlane.xlu0 %711
        %v713 = vsub.f32 %v704, %v712
        %v714 = vmul.f32 %v713, 1.442695
        %v715 = vpow.pop %v714
        %v716 = vsel %vm709, %v715, 0.0
        %717 = vadd.xlane.f32.xlu0 %v716
        %v718 = vpop.xlane.xlu0 %717
        %v719 = vrcp.pop %v718
        %v720 = vmul.f32 %v715, %v719
        %v721 = vpack.c.bf16 %v720, %v720
        %v723 = vsel %vm709, %v721, 0
        %vm725 = vcmask 1043456
        %v727 = vsel %vm725, %v667, 0
        %729 = vmatprep.subr.bf16.mxu0 0
        %730 = vmatpush1.bf16.msra.mxu0 %v727
        %731 = vmatprep.subr.bf16.mxu0 0
        %732 = vmatpush1.bf16.msra.mxu0 0
        %733 = vmatprep.subr.bf16.mxu0 0
        %734 = vmatpush1.bf16.msra.mxu0 0
        %735 = vmatprep.subr.bf16.mxu0 0
        %736 = vmatpush1.bf16.msra.mxu0 0
        %737 = vmatprep.subr.bf16.mxu0 0
        %738 = vmatpush1.bf16.msra.mxu0 0
        %739 = vmatprep.subr.bf16.mxu0 0
        %740 = vmatpush1.bf16.msra.mxu0 0
        %741 = vmatprep.subr.bf16.mxu0 0
        %742 = vmatpush1.bf16.msra.mxu0 0
        %743 = vmatprep.subr.bf16.mxu0 0
        %744 = vmatpush1.bf16.msra.mxu0 0
        %745 = vmatprep.subr.bf16.mxu0 0
        %746 = vmatpush1.bf16.msra.mxu0 0
        %747 = vmatprep.subr.bf16.mxu0 0
        %748 = vmatpush1.bf16.msra.mxu0 0
        %749 = vmatprep.subr.bf16.mxu0 0
        %750 = vmatpush1.bf16.msra.mxu0 0
        %751 = vmatprep.subr.bf16.mxu0 0
        %752 = vmatpush1.bf16.msra.mxu0 0
        %753 = vmatprep.subr.bf16.mxu0 0
        %754 = vmatpush1.bf16.msra.mxu0 0
        %755 = vmatprep.subr.bf16.mxu0 0
        %756 = vmatpush1.bf16.msra.mxu0 0
        %757 = vmatprep.subr.bf16.mxu0 0
        %758 = vmatpush1.bf16.msra.mxu0 0
        %759 = vmatprep.subr.bf16.mxu0 0
        %760 = vmatpush1.bf16.msra.mxu0 0
        %761 = vmatprep.mubr.bf16.mxu0 0
        %762 = vmatmul.mubr.bf16.gmra.mrb[0].mxu0 %v723
        %v763 = vpop.f32.mrb[0].mxu0
        %v764 = vadd.f32 0.0, %v763
        %v765 = vpop.f32.mrb[0].mxu0
        %v766 = vpop.f32.mrb[0].mxu0
        %v767 = vpop.f32.mrb[0].mxu0
        %768 = vdwg.mxu0
        %v769 = vpack.c.bf16 %v764, %v764
        %v770 = vld [vmem:[%s5] sm:$0xf]
        %v771 = vld [vmem:[%s5 + $0x4] sm:$0xf]
        %v772 = vld [vmem:[%s5 + $0x8] sm:$0xf]
        %v773 = vld [vmem:[%s5 + $0xc] sm:$0xf]
        %v774 = vld [vmem:[%s5 + $0x10] sm:$0xf]
        %v775 = vld [vmem:[%s5 + $0x14] sm:$0xf]
        %v776 = vld [vmem:[%s5 + $0x18] sm:$0xf]
        %v777 = vld [vmem:[%s5 + $0x1c] sm:$0xf]
        %v778 = vld [vmem:[%s5 + $0x20] sm:$0xf]
        %v779 = vld [vmem:[%s5 + $0x24] sm:$0xf]
        %v780 = vld [vmem:[%s5 + $0x28] sm:$0xf]
        %v781 = vld [vmem:[%s5 + $0x2c] sm:$0xf]
        %v782 = vld [vmem:[%s5 + $0x30] sm:$0xf]
        %v783 = vld [vmem:[%s5 + $0x34] sm:$0xf]
        %v784 = vld [vmem:[%s5 + $0x38] sm:$0xf]
        %v785 = vld [vmem:[%s5 + $0x3c] sm:$0xf]
        %v786 = vld [vmem:[%s6] sm:$0x1]
        %v788 = vlaneseq
        %v789 = vshrl.u32 %v788, 7
        %v790 = vsub.s32 0, %v789
        %v791 = vrot.slane %v786, %v790
        %v809 = vunpack.c.l.b16 %v770
        %v810 = vunpack.c.l.b16 %v771
        %v811 = vunpack.c.l.b16 %v772
        %v812 = vunpack.c.l.b16 %v773
        %v813 = vunpack.c.l.b16 %v774
        %v814 = vunpack.c.l.b16 %v775
        %v815 = vunpack.c.l.b16 %v776
        %v816 = vunpack.c.l.b16 %v777
        %v817 = vunpack.c.l.b16 %v778
        %v818 = vunpack.c.l.b16 %v779
        %v819 = vunpack.c.l.b16 %v780
        %v820 = vunpack.c.l.b16 %v781
        %v821 = vunpack.c.l.b16 %v782
        %v822 = vunpack.c.l.b16 %v783
        %v823 = vunpack.c.l.b16 %v784
        %v824 = vunpack.c.l.b16 %v785
        %v825 = vpack.c.b16 %v810, %v809
        %v826 = vpack.c.b16 %v812, %v811
        %v827 = vpack.c.b16 %v814, %v813
        %v828 = vpack.c.b16 %v816, %v815
        %v829 = vpack.c.b16 %v818, %v817
        %v830 = vpack.c.b16 %v820, %v819
        %v831 = vpack.c.b16 %v822, %v821
        %v832 = vpack.c.b16 %v824, %v823
        %841 = vmatprep.subr.bf16.mxu0 0
        %842 = vmatpush1.bf16.msra.mxu0 %v825
        %843 = vmatprep.subr.bf16.mxu0 0
        %844 = vmatpush1.bf16.msra.mxu0 %v826
        %845 = vmatprep.subr.bf16.mxu0 0
        %846 = vmatpush1.bf16.msra.mxu0 %v827
        %847 = vmatprep.subr.bf16.mxu0 0
        %848 = vmatpush1.bf16.msra.mxu0 %v828
        %849 = vmatprep.subr.bf16.mxu0 0
        %850 = vmatpush1.bf16.msra.mxu0 %v829
        %851 = vmatprep.subr.bf16.mxu0 0
        %852 = vmatpush1.bf16.msra.mxu0 %v830
        %853 = vmatprep.subr.bf16.mxu0 0
        %854 = vmatpush1.bf16.msra.mxu0 %v831
        %855 = vmatprep.subr.bf16.mxu0 0
        %856 = vmatpush1.bf16.msra.mxu0 %v832
        %857 = vmatprep.subr.bf16.mxu0 0
        %858 = vmatpush1.bf16.msra.mxu0 0
        %859 = vmatprep.subr.bf16.mxu0 0
        %860 = vmatpush1.bf16.msra.mxu0 0
        %861 = vmatprep.subr.bf16.mxu0 0
        %862 = vmatpush1.bf16.msra.mxu0 0
        %863 = vmatprep.subr.bf16.mxu0 0
        %864 = vmatpush1.bf16.msra.mxu0 0
        %865 = vmatprep.subr.bf16.mxu0 0
        %866 = vmatpush1.bf16.msra.mxu0 0
        %867 = vmatprep.subr.bf16.mxu0 0
        %868 = vmatpush1.bf16.msra.mxu0 0
        %869 = vmatprep.subr.bf16.mxu0 0
        %870 = vmatpush1.bf16.msra.mxu0 0
        %871 = vmatprep.subr.bf16.mxu0 0
        %872 = vmatpush1.bf16.msra.mxu0 0
        %873 = vmatprep.mubr.bf16.mxu0 0
        %874 = vmatmul.mubr.bf16.gmra.mrb[0].mxu0 %v769
        %v875 = vpop.f32.mrb[0].mxu0
        %v876 = vadd.f32 %v791, %v875
        %v877 = vpop.f32.mrb[0].mxu0
        %v878 = vpop.f32.mrb[0].mxu0
        %v879 = vpop.f32.mrb[0].mxu0
        %880 = vdwg.mxu0
        %v881 = vmax.f32 %v876, 0.0
        %v882 = vpack.c.bf16 %v881, %v881
        %v883 = vld [vmem:[%s7] sm:$0xf]
        %v884 = vld [vmem:[%s7 + $0x4] sm:$0xf]
        %v885 = vld [vmem:[%s7 + $0x8] sm:$0xf]
        %v886 = vld [vmem:[%s7 + $0xc] sm:$0xf]
        %v887 = vld [vmem:[%s7 + $0x10] sm:$0xf]
        %v888 = vld [vmem:[%s7 + $0x14] sm:$0xf]
        %v889 = vld [vmem:[%s7 + $0x18] sm:$0xf]
        %v890 = vld [vmem:[%s7 + $0x1c] sm:$0xf]
        %v891 = vld [vmem:[%s7 + $0x20] sm:$0xf]
        %v892 = vld [vmem:[%s7 + $0x24] sm:$0xf]
        %v893 = vld [vmem:[%s7 + $0x28] sm:$0xf]
        %v894 = vld [vmem:[%s7 + $0x2c] sm:$0xf]
        %v895 = vld [vmem:[%s7 + $0x30] sm:$0xf]
        %v896 = vld [vmem:[%s7 + $0x34] sm:$0xf]
        %v897 = vld [vmem:[%s7 + $0x38] sm:$0xf]
        %v898 = vld [vmem:[%s7 + $0x3c] sm:$0xf]
        %v899 = vld [vmem:[%s8] sm:$0x1]
        %v901 = vlaneseq
        %v902 = vshrl.u32 %v901, 7
        %v903 = vsub.s32 0, %v902
        %v904 = vrot.slane %v899, %v903
        %v922 = vunpack.c.l.b16 %v883
        %v923 = vunpack.c.l.b16 %v884
        %v924 = vunpack.c.l.b16 %v885
        %v925 = vunpack.c.l.b16 %v886
        %v926 = vunpack.c.l.b16 %v887
        %v927 = vunpack.c.l.b16 %v888
        %v928 = vunpack.c.l.b16 %v889
        %v929 = vunpack.c.l.b16 %v890
        %v930 = vunpack.c.l.b16 %v891
        %v931 = vunpack.c.l.b16 %v892
        %v932 = vunpack.c.l.b16 %v893
        %v933 = vunpack.c.l.b16 %v894
        %v934 = vunpack.c.l.b16 %v895
        %v935 = vunpack.c.l.b16 %v896
        %v936 = vunpack.c.l.b16 %v897
        %v937 = vunpack.c.l.b16 %v898
        %v938 = vpack.c.b16 %v923, %v922
        %v939 = vpack.c.b16 %v925, %v924
        %v940 = vpack.c.b16 %v927, %v926
        %v941 = vpack.c.b16 %v929, %v928
        %v942 = vpack.c.b16 %v931, %v930
        %v943 = vpack.c.b16 %v933, %v932
        %v944 = vpack.c.b16 %v935, %v934
        %v945 = vpack.c.b16 %v937, %v936
        %954 = vmatprep.subr.bf16.mxu0 0
        %955 = vmatpush1.bf16.msra.mxu0 %v938
        %956 = vmatprep.subr.bf16.mxu0 0
        %957 = vmatpush1.bf16.msra.mxu0 %v939
        %958 = vmatprep.subr.bf16.mxu0 0
        %959 = vmatpush1.bf16.msra.mxu0 %v940
        %960 = vmatprep.subr.bf16.mxu0 0
        %961 = vmatpush1.bf16.msra.mxu0 %v941
        %962 = vmatprep.subr.bf16.mxu0 0
        %963 = vmatpush1.bf16.msra.mxu0 %v942
        %964 = vmatprep.subr.bf16.mxu0 0
        %965 = vmatpush1.bf16.msra.mxu0 %v943
        %966 = vmatprep.subr.bf16.mxu0 0
        %967 = vmatpush1.bf16.msra.mxu0 %v944
        %968 = vmatprep.subr.bf16.mxu0 0
        %969 = vmatpush1.bf16.msra.mxu0 %v945
        %970 = vmatprep.subr.bf16.mxu0 0
        %971 = vmatpush1.bf16.msra.mxu0 0
        %972 = vmatprep.subr.bf16.mxu0 0
        %973 = vmatpush1.bf16.msra.mxu0 0
        %974 = vmatprep.subr.bf16.mxu0 0
        %975 = vmatpush1.bf16.msra.mxu0 0
        %976 = vmatprep.subr.bf16.mxu0 0
        %977 = vmatpush1.bf16.msra.mxu0 0
        %978 = vmatprep.subr.bf16.mxu0 0
        %979 = vmatpush1.bf16.msra.mxu0 0
        %980 = vmatprep.subr.bf16.mxu0 0
        %981 = vmatpush1.bf16.msra.mxu0 0
        %982 = vmatprep.subr.bf16.mxu0 0
        %983 = vmatpush1.bf16.msra.mxu0 0
        %984 = vmatprep.subr.bf16.mxu0 0
        %985 = vmatpush1.bf16.msra.mxu0 0
        %986 = vmatprep.mubr.bf16.mxu0 0
        %987 = vmatmul.mubr.bf16.gmra.mrb[0].mxu0 %v882
        %v988 = vpop.f32.mrb[0].mxu0
        %v989 = vadd.f32 %v904, %v988
        %v990 = vpop.f32.mrb[0].mxu0
        %v991 = vpop.f32.mrb[0].mxu0
        %v992 = vpop.f32.mrb[0].mxu0
        %993 = vdwg.mxu0
        %v994 = vsel %vm362, %v989, -inf
        %995 = vmax.xlane.f32.xlu0 %v994
        %v996 = vpop.xlane.xlu0 %995
        %v997 = vsub.f32 %v989, %v996
        %v998 = vmul.f32 %v997, 1.442695
        %v999 = vpow.pop %v998
        %v1000 = vsel %vm362, %v999, 0.0
        %1001 = vadd.xlane.f32.xlu0 %v1000
        %v1002 = vpop.xlane.xlu0 %1001
        %v1003 = vlog2.pop %v1002
        %v1004 = vmul.f32 %v1003, 0.6931472
        %v1005 = vadd.f32 %v1004, %v996
        %v1006 = vsub.f32 %v989, %v1005
        %1007 = vst.msk [vmem:[%s338] sm:$0xff] %vm362, %v1006
        %s1008 = sand.u32 %s226, 1
        %s1009 = scalar_lea.sflag [#allocation4], %s1008
        %s1010 = sand.u32 %s226, 1
        %s1011 = smul.addr %s1010, 8
        %s1012 = scalar_lea.vmem [#allocation5], %s1011
        // Predicated region
        $region61: #{tpu_custom_call.1} parent=55 // pred_check
          %p1013 = pneg %p236
        $region62: #{tpu_custom_call.1} parent=55 // pred_check_branch
          %1015 = sbr.rel (%p1013) target = $region64
        $region63: #{tpu_custom_call.1} parent=55 // pred_region
          %s1017 = ssub.s32 128, 128
          %1018 = vsyncadd %s1009, %s1017
          %s1019 = smul.addr %s24, 128
          %s1020 = scalar_lea.hbm %s9, %s1019
          %s1022 = sshll.u32 %s1012, 4
          %s1023 = int_to_ptr.vmem [resolvable:$true] %s1022
          %1025 = dma.vmem_to_hbm [thread:$0]  %s1023, 128, %s1020, %s1009
        $region64: #{tpu_custom_call.1} parent=55 // pred_fallthru
          _
      $region56: #{tpu_custom_call.1} parent=5 // pred_fallthru
        _
      %p1026 = scmp.le.s32.totalorder 2, %s19
      // Predicated region
      $region65: #{tpu_custom_call.1} parent=5 // pred_check
        %p1027 = pneg %p1026
      $region66: #{tpu_custom_call.1} parent=5 // pred_check_branch
        %1029 = sbr.rel (%p1027) target = $region68
      $region67: #{tpu_custom_call.1} parent=5 // pred_region
        %s1030 = ssub.s32 %s19, 2
        // Predicated region
        $region69: #{tpu_custom_call.1} parent=67 // pred_check
          %p1031 = pneg %p242
        $region70: #{tpu_custom_call.1} parent=67 // pred_check_branch
          %1033 = sbr.rel (%p1031) target = $region72
        $region71: #{tpu_custom_call.1} parent=67 // pred_region
          %s1034 = sand.u32 %s227, 1
          %s1035 = scalar_lea.sflag [#allocation4], %s1034
          %s1036 = sand.u32 %s227, 1
          %s1037 = smul.addr %s1036, 8
          %s1038 = scalar_lea.vmem [#allocation5], %s1037
          %1039 = dma.done %s1035, 128
        $region72: #{tpu_custom_call.1} parent=67 // pred_fallthru
          _
      $region68: #{tpu_custom_call.1} parent=5 // pred_fallthru
        _
    $region6: #{tpu_custom_call.1} parent=1 // loop_footer
      %s23 = sadd.s32 1, %s19
    $region7: #{tpu_custom_call.1} parent=1 // loop_footer_branch
      %18 = sbr.rel target = $region3
    $region8: #{tpu_custom_call.1} parent=1 // loop_exit
      _
    %1040 = vsyncpa [#allocation3], 1
    %s1041 = scalar_lea.sflag [#allocation3], 1
    %1042 = vsyncpa %s1041, 1
    %1043 = vsyncpa [#allocation4], 1
    %s1044 = scalar_lea.sflag [#allocation4], 1
    %1045 = vsyncpa %s1044, 1

</llo_original>
